<compile_context>
chip_gen: v6e
topology: v6e:2x2x1
jax: 0.10.0
libtpu: 0.0.40
codegen_flags: <defaults>
</compile_context>

<pallas_src>
import jax
import jax.numpy as jnp
from jax import lax
from jax.experimental import pallas as pl
from jax.experimental.pallas import tpu as pltpu


def _log_sigmoid(x):
    # Numerically stable log(sigmoid(x)) = min(x, 0) - log1p(exp(-|x|)).
    return jnp.minimum(x, 0.0) - jnp.log1p(jnp.exp(-jnp.abs(x)))


def _make_skipgram_kernel(tile_b, K, D, V, B, tiles_per_core):
    """Batch-tiled skip-gram loss kernel with one-hot MXU embedding gather."""

    def kernel(pos_u_ref, pos_v_ref, neg_ref,     # id tiles (VMEM, int32)
               u_tab_ref, v_tab_ref,              # full tables (VMEM, bf16)
               loss_ref,                          # (1,1,1) f32 per-core output
               acc_ref):                          # (1,1) f32 VMEM accumulator
        p = pl.program_id(0)          # core-parallel axis
        j = pl.program_id(1)          # serial batch-tile axis
        nj = pl.num_programs(1)

        @pl.when(j == 0)
        def _():
            acc_ref[...] = jnp.zeros_like(acc_ref)

        # Hoist table loads out of the K loop.
        u_tab = u_tab_ref[...]        # (V, D) bf16
        v_tab = v_tab_ref[...]        # (V, D) bf16

        def gather(ids_col, table):
            # ids_col: (tile_b, 1) int32 -> one-hot (tile_b, V) -> MXU matmul.
            onehot = (lax.broadcasted_iota(jnp.int32, (tile_b, V), 1)
                      == ids_col).astype(table.dtype)
            return jnp.dot(onehot, table, preferred_element_type=jnp.float32)

        pos_u_ids = pos_u_ref[0]      # (tile_b, 1)
        pos_v_ids = pos_v_ref[0]      # (tile_b, 1)
        neg_ids = neg_ref[0]          # (tile_b, K)

        emb_u = gather(pos_u_ids, u_tab)          # (tile_b, D) f32
        emb_v = gather(pos_v_ids, v_tab)          # (tile_b, D) f32

        # Positive-pair term.
        pos_score = jnp.sum(emb_u * emb_v, axis=-1, keepdims=True)
        row_ls = _log_sigmoid(pos_score)          # (tile_b, 1)

        # Static (unrolled) loop over the K negative samples.
        for k in range(K):
            neg_k = gather(neg_ids[:, k:k + 1], v_tab)       # (tile_b, D)
            neg_score = jnp.sum(neg_k * emb_u, axis=-1, keepdims=True)
            row_ls = row_ls + _log_sigmoid(-neg_score)

        # Mask out batch-padding rows (global row index >= B).
        tile_idx = p * tiles_per_core + j
        row = (lax.broadcasted_iota(jnp.int32, (tile_b, 1), 0)
               + tile_idx * tile_b)
        mask = (row < B).astype(jnp.float32)

        tile_total = jnp.sum(row_ls * mask)
        acc_ref[...] += jnp.broadcast_to(-tile_total, (1, 1))

        @pl.when(j == nj - 1)
        def _():
            loss_ref[0] = acc_ref[...]

    return kernel


def skipgram_forward(u_weight, v_weight, pos_u, pos_v, neg_v, *,
                     tile_b=None, num_cores=2,
                     transport_dtype=jnp.bfloat16):
    """Equivalent of SkipGramModel.forward.

    Args:
      u_weight: (V, D) center-word embedding table.
      v_weight: (V, D) context-word embedding table.
      pos_u:    (B,)   center word ids.
      pos_v:    (B,)   positive context word ids.
      neg_v:    (B, K) negative-sample context word ids.
    Returns:
      scalar float32 loss.
    """
    V, D = u_weight.shape
    B = int(pos_u.shape[0])
    K = int(neg_v.shape[1])

    if tile_b is None:
        # Large tiles amortize per-grid-step overhead; cap so the per-gather
        # one-hot (tile_b, V) stays modest.
        tile_b = max(8, min(512, ((B + 7) // 8) * 8))

    num_cores = max(1, int(num_cores))
    tiles_needed = -(-B // tile_b)
    tiles_per_core = -(-tiles_needed // num_cores)
    num_tiles = tiles_per_core * num_cores
    b_pad = num_tiles * tile_b

    # TODO(synk): fall back to an HBM-resident DMA row gather when the tables
    # do not fit comfortably in VMEM (very large vocabularies).
    table_vmem_bytes = 2 * V * max(D, 128) * jnp.dtype(transport_dtype).itemsize
    assert table_vmem_bytes < 24 * 1024 * 1024, (
        "embedding tables too large for the VMEM-resident one-hot gather path")

    pad = b_pad - B
    pos_u_p = jnp.pad(pos_u.astype(jnp.int32), (0, pad))
    pos_v_p = jnp.pad(pos_v.astype(jnp.int32), (0, pad))
    neg_p = jnp.pad(neg_v.astype(jnp.int32), ((0, pad), (0, 0)))

    # ids laid out so each tile presents a (tile_b, 1) column to the kernel
    # (broadcasts directly against the lane-iota for the one-hot).
    pos_u3 = pos_u_p.reshape(num_tiles, tile_b, 1)
    pos_v3 = pos_v_p.reshape(num_tiles, tile_b, 1)
    neg3 = neg_p.reshape(num_tiles, tile_b, K)

    # bf16 transport of the tables (MXU-native); all score math is f32.
    u_w = u_weight.astype(transport_dtype)
    v_w = v_weight.astype(transport_dtype)

    kernel = _make_skipgram_kernel(tile_b, K, D, V, B, tiles_per_core)

    id_map = lambda p, j: (p * tiles_per_core + j, 0, 0)
    tab_map = lambda p, j: (0, 0)     # constant -> table stays VMEM-resident

    out = pl.pallas_call(
        kernel,
        out_shape=jax.ShapeDtypeStruct((num_cores, 1, 1), jnp.float32),
        grid_spec=pltpu.PrefetchScalarGridSpec(
            num_scalar_prefetch=0,
            grid=(num_cores, tiles_per_core),
            in_specs=[
                pl.BlockSpec((1, tile_b, 1), id_map),
                pl.BlockSpec((1, tile_b, 1), id_map),
                pl.BlockSpec((1, tile_b, K), id_map),
                pl.BlockSpec((V, D), tab_map),
                pl.BlockSpec((V, D), tab_map),
            ],
            out_specs=pl.BlockSpec((1, 1, 1), lambda p, j: (p, 0, 0)),
            scratch_shapes=[pltpu.VMEM((1, 1), jnp.float32)],
        ),
        compiler_params=pltpu.CompilerParams(
            # Leading axis parallel (2 TCs on v7x, serial elsewhere);
            # inner axis arbitrary for the resident accumulator.
            dimension_semantics=("parallel", "arbitrary"),
            vmem_limit_bytes=32 * 1024 * 1024,
        ),
    )(pos_u3, pos_v3, neg3, u_w, v_w)

    # One partial loss per core; reduce in the wrapper.
    return jnp.sum(out)


if __name__ == "__main__":
    # Small shapes consistent with the module's constructor arguments.
    emb_size = 256       # vocabulary size V
    emb_dimension = 32   # embedding dim D
    batch_size = 200     # B (deliberately not a tile multiple -> exercises mask)
    num_negatives = 5    # K
    tile_b = 32          # small tile for the self-test (default is 512)

    key = jax.random.PRNGKey(0)
    k_u, k_v, k_pu, k_pv, k_nv = jax.random.split(key, 5)

    initrange = 0.5 / emb_dimension
    u_weight = jax.random.uniform(
        k_u, (emb_size, emb_dimension), jnp.float32,
        minval=-initrange, maxval=initrange)
    # The PyTorch module initializes v_embeddings to zero; use small random
    # values here so the self-test actually exercises the gathered v rows.
    v_weight = jax.random.uniform(
        k_v, (emb_size, emb_dimension), jnp.float32,
        minval=-initrange, maxval=initrange)

    pos_u = jax.random.randint(k_pu, (batch_size,), 0, emb_size, jnp.int32)
    pos_v = jax.random.randint(k_pv, (batch_size,), 0, emb_size, jnp.int32)
    neg_v = jax.random.randint(
        k_nv, (batch_size, num_negatives), 0, emb_size, jnp.int32)

    loss = skipgram_forward(u_weight, v_weight, pos_u, pos_v, neg_v,
                            tile_b=tile_b)
    loss = jax.block_until_ready(loss)

    # Pure-JAX reference of the same math on the same bf16-transported rows.
    u_w = u_weight.astype(jnp.bfloat16).astype(jnp.float32)
    v_w = v_weight.astype(jnp.bfloat16).astype(jnp.float32)
    emb_u = jnp.take(u_w, pos_u, axis=0)
    emb_v = jnp.take(v_w, pos_v, axis=0)
    neg_emb_v = jnp.take(v_w, neg_v, axis=0)
    score = jax.nn.log_sigmoid(jnp.sum(emb_u * emb_v, axis=1))
    neg_score = jax.nn.log_sigmoid(-jnp.einsum("bkd,bd->bk", neg_emb_v, emb_u))
    ref = -(jnp.sum(score) + jnp.sum(neg_score))

    assert jnp.allclose(loss, ref, rtol=2e-4, atol=1e-2), (loss, ref)
    print("KERNEL_OK")
</pallas_src>

<mosaic_0001>
module attributes {stable_mosaic.version = 11 : i64} {
  func.func @kernel(%arg0: i32, %arg1: i32, %arg2: memref<1x32x1xi32, #tpu.memory_space<vmem>>, %arg3: memref<1x32x1xi32, #tpu.memory_space<vmem>>, %arg4: memref<1x32x5xi32, #tpu.memory_space<vmem>>, %arg5: memref<256x32xbf16, #tpu.memory_space<vmem>>, %arg6: memref<256x32xbf16, #tpu.memory_space<vmem>>, %arg7: memref<1x1x1xf32, #tpu.memory_space<vmem>>, %arg8: memref<1x1xf32, #tpu.memory_space<vmem>>) attributes {dimension_semantics = [#tpu.dimension_semantics<parallel>, #tpu.dimension_semantics<arbitrary>], iteration_bounds = array<i64: 2, 4>, scalar_prefetch = 0 : i64, scratch_operands = 1 : i64, tpu.core_type = #tpu.core_type<tc>, window_params = [{transform_indices = @transform_0, window_bounds = array<i64: 1, 32, 1>}, {transform_indices = @transform_1, window_bounds = array<i64: 1, 32, 1>}, {transform_indices = @transform_2, window_bounds = array<i64: 1, 32, 5>}, {pipeline_mode = #tpu.pipeline_mode<synchronous>, transform_indices = @transform_3, window_bounds = array<i64: 256, 32>}, {pipeline_mode = #tpu.pipeline_mode<synchronous>, transform_indices = @transform_4, window_bounds = array<i64: 256, 32>}, {transform_indices = @transform_5, window_bounds = array<i64: 1, 1, 1>}]} {
    %c0_i32 = arith.constant 0 : i32
    %0 = arith.cmpi eq, %arg1, %c0_i32 : i32
    %1 = arith.extui %0 : i1 to i32
    %c0_i32_0 = arith.constant 0 : i32
    %2 = arith.cmpi ne, %1, %c0_i32_0 : i32
    scf.if %2 {
      %cst_49 = arith.constant 0.000000e+00 : f32
      %169 = vector.broadcast %cst_49 : f32 to vector<1x1xf32>
      %c0_50 = arith.constant 0 : index
      %c0_51 = arith.constant 0 : index
      %170 = vector.load %arg8[%c0_50, %c0_51] : memref<1x1xf32, #tpu.memory_space<vmem>>, vector<1x1xf32>
      tpu.vector_store %arg8[%c0_50, %c0_51], %169 {strides = array<i32>} : memref<1x1xf32, #tpu.memory_space<vmem>>, vector<1x1xf32>,
    } else {
    }
    %c0 = arith.constant 0 : index
    %c0_1 = arith.constant 0 : index
    %3 = vector.load %arg5[%c0, %c0_1] : memref<256x32xbf16, #tpu.memory_space<vmem>>, vector<256x32xbf16>
    %c0_2 = arith.constant 0 : index
    %c0_3 = arith.constant 0 : index
    %4 = vector.load %arg6[%c0_2, %c0_3] : memref<256x32xbf16, #tpu.memory_space<vmem>>, vector<256x32xbf16>
    %c0_4 = arith.constant 0 : index
    %c0_5 = arith.constant 0 : index
    %c0_6 = arith.constant 0 : index
    %5 = vector.load %arg2[%c0_4, %c0_5, %c0_6] : memref<1x32x1xi32, #tpu.memory_space<vmem>>, vector<1x32x1xi32>
    %6 = vector.shape_cast %5 : vector<1x32x1xi32> to vector<32x1xi32>
    %c0_7 = arith.constant 0 : index
    %c0_8 = arith.constant 0 : index
    %c0_9 = arith.constant 0 : index
    %7 = vector.load %arg3[%c0_7, %c0_8, %c0_9] : memref<1x32x1xi32, #tpu.memory_space<vmem>>, vector<1x32x1xi32>
    %8 = vector.shape_cast %7 : vector<1x32x1xi32> to vector<32x1xi32>
    %c0_10 = arith.constant 0 : index
    %c0_11 = arith.constant 0 : index
    %c0_12 = arith.constant 0 : index
    %9 = vector.load %arg4[%c0_10, %c0_11, %c0_12] : memref<1x32x5xi32, #tpu.memory_space<vmem>>, vector<1x32x5xi32>
    %10 = vector.shape_cast %9 : vector<1x32x5xi32> to vector<32x5xi32>
    %11 = tpu.iota {dimensions = array<i32: 1>} : vector<32x256xi32>
    %12 = vector.broadcast %6 : vector<32x1xi32> to vector<32x256xi32>
    %13 = arith.cmpi eq, %11, %12 : vector<32x256xi32>
    %14 = arith.extui %13 : vector<32x256xi1> to vector<32x256xi32>
    %15 = arith.sitofp %14 : vector<32x256xi32> to vector<32x256xf32>
    %16 = arith.truncf %15 : vector<32x256xf32> to vector<32x256xbf16>
    %cst = arith.constant dense<0.000000e+00> : vector<32x32xf32>
    %17 = tpu.matmul %16, %3, %cst {dimension_numbers = #tpu.dot_dimension_numbers<[1], [0], [0], [1], [0, 0, 1, 1], [], []>} : vector<32x256xbf16>, vector<256x32xbf16>, vector<32x32xf32> -> vector<32x32xf32>
    %18 = tpu.iota {dimensions = array<i32: 1>} : vector<32x256xi32>
    %19 = vector.broadcast %8 : vector<32x1xi32> to vector<32x256xi32>
    %20 = arith.cmpi eq, %18, %19 : vector<32x256xi32>
    %21 = arith.extui %20 : vector<32x256xi1> to vector<32x256xi32>
    %22 = arith.sitofp %21 : vector<32x256xi32> to vector<32x256xf32>
    %23 = arith.truncf %22 : vector<32x256xf32> to vector<32x256xbf16>
    %cst_13 = arith.constant dense<0.000000e+00> : vector<32x32xf32>
    %24 = tpu.matmul %23, %4, %cst_13 {dimension_numbers = #tpu.dot_dimension_numbers<[1], [0], [0], [1], [0, 0, 1, 1], [], []>} : vector<32x256xbf16>, vector<256x32xbf16>, vector<32x32xf32> -> vector<32x32xf32>
    %25 = arith.mulf %17, %24 : vector<32x32xf32>
    %cst_14 = arith.constant dense<0.000000e+00> : vector<32xf32>
    %26 = vector.multi_reduction <add>, %25, %cst_14 [1] : vector<32x32xf32> to vector<32xf32>
    %27 = vector.shape_cast %26 : vector<32xf32> to vector<32x1xf32>
    %cst_15 = arith.constant 0.000000e+00 : f32
    %28 = vector.broadcast %cst_15 : f32 to vector<32x1xf32>
    %29 = arith.minimumf %27, %28 : vector<32x1xf32>
    %30 = math.absf %27 : vector<32x1xf32>
    %cst_16 = arith.constant 0.000000e+00 : f32
    %31 = vector.broadcast %cst_16 : f32 to vector<32x1xf32>
    %32 = arith.subf %31, %30 : vector<32x1xf32>
    %33 = math.exp %32 : vector<32x1xf32>
    %34 = math.log1p %33 : vector<32x1xf32>
    %35 = arith.subf %29, %34 : vector<32x1xf32>
    %36 = vector.extract_strided_slice %10 {offsets = [0, 0], sizes = [32, 1], strides = [1, 1]} : vector<32x5xi32> to vector<32x1xi32>
    %37 = tpu.iota {dimensions = array<i32: 1>} : vector<32x256xi32>
    %38 = vector.broadcast %36 : vector<32x1xi32> to vector<32x256xi32>
    %39 = arith.cmpi eq, %37, %38 : vector<32x256xi32>
    %40 = arith.extui %39 : vector<32x256xi1> to vector<32x256xi32>
    %41 = arith.sitofp %40 : vector<32x256xi32> to vector<32x256xf32>
    %42 = arith.truncf %41 : vector<32x256xf32> to vector<32x256xbf16>
    %cst_17 = arith.constant dense<0.000000e+00> : vector<32x32xf32>
    %43 = tpu.matmul %42, %4, %cst_17 {dimension_numbers = #tpu.dot_dimension_numbers<[1], [0], [0], [1], [0, 0, 1, 1], [], []>} : vector<32x256xbf16>, vector<256x32xbf16>, vector<32x32xf32> -> vector<32x32xf32>
    %44 = arith.mulf %43, %17 : vector<32x32xf32>
    %cst_18 = arith.constant dense<0.000000e+00> : vector<32xf32>
    %45 = vector.multi_reduction <add>, %44, %cst_18 [1] : vector<32x32xf32> to vector<32xf32>
    %46 = vector.shape_cast %45 : vector<32xf32> to vector<32x1xf32>
    %cst_19 = arith.constant 0.000000e+00 : f32
    %47 = vector.broadcast %cst_19 : f32 to vector<32x1xf32>
    %48 = arith.subf %47, %46 : vector<32x1xf32>
    %cst_20 = arith.constant 0.000000e+00 : f32
    %49 = vector.broadcast %cst_20 : f32 to vector<32x1xf32>
    %50 = arith.minimumf %48, %49 : vector<32x1xf32>
    %51 = math.absf %48 : vector<32x1xf32>
    %cst_21 = arith.constant 0.000000e+00 : f32
    %52 = vector.broadcast %cst_21 : f32 to vector<32x1xf32>
    %53 = arith.subf %52, %51 : vector<32x1xf32>
    %54 = math.exp %53 : vector<32x1xf32>
    %55 = math.log1p %54 : vector<32x1xf32>
    %56 = arith.subf %50, %55 : vector<32x1xf32>
    %57 = arith.addf %35, %56 : vector<32x1xf32>
    %58 = vector.extract_strided_slice %10 {offsets = [0, 1], sizes = [32, 1], strides = [1, 1]} : vector<32x5xi32> to vector<32x1xi32>
    %59 = tpu.iota {dimensions = array<i32: 1>} : vector<32x256xi32>
    %60 = vector.broadcast %58 : vector<32x1xi32> to vector<32x256xi32>
    %61 = arith.cmpi eq, %59, %60 : vector<32x256xi32>
    %62 = arith.extui %61 : vector<32x256xi1> to vector<32x256xi32>
    %63 = arith.sitofp %62 : vector<32x256xi32> to vector<32x256xf32>
    %64 = arith.truncf %63 : vector<32x256xf32> to vector<32x256xbf16>
    %cst_22 = arith.constant dense<0.000000e+00> : vector<32x32xf32>
    %65 = tpu.matmul %64, %4, %cst_22 {dimension_numbers = #tpu.dot_dimension_numbers<[1], [0], [0], [1], [0, 0, 1, 1], [], []>} : vector<32x256xbf16>, vector<256x32xbf16>, vector<32x32xf32> -> vector<32x32xf32>
    %66 = arith.mulf %65, %17 : vector<32x32xf32>
    %cst_23 = arith.constant dense<0.000000e+00> : vector<32xf32>
    %67 = vector.multi_reduction <add>, %66, %cst_23 [1] : vector<32x32xf32> to vector<32xf32>
    %68 = vector.shape_cast %67 : vector<32xf32> to vector<32x1xf32>
    %cst_24 = arith.constant 0.000000e+00 : f32
    %69 = vector.broadcast %cst_24 : f32 to vector<32x1xf32>
    %70 = arith.subf %69, %68 : vector<32x1xf32>
    %cst_25 = arith.constant 0.000000e+00 : f32
    %71 = vector.broadcast %cst_25 : f32 to vector<32x1xf32>
    %72 = arith.minimumf %70, %71 : vector<32x1xf32>
    %73 = math.absf %70 : vector<32x1xf32>
    %cst_26 = arith.constant 0.000000e+00 : f32
    %74 = vector.broadcast %cst_26 : f32 to vector<32x1xf32>
    %75 = arith.subf %74, %73 : vector<32x1xf32>
    %76 = math.exp %75 : vector<32x1xf32>
    %77 = math.log1p %76 : vector<32x1xf32>
    %78 = arith.subf %72, %77 : vector<32x1xf32>
    %79 = arith.addf %57, %78 : vector<32x1xf32>
    %80 = vector.extract_strided_slice %10 {offsets = [0, 2], sizes = [32, 1], strides = [1, 1]} : vector<32x5xi32> to vector<32x1xi32>
    %81 = tpu.iota {dimensions = array<i32: 1>} : vector<32x256xi32>
    %82 = vector.broadcast %80 : vector<32x1xi32> to vector<32x256xi32>
    %83 = arith.cmpi eq, %81, %82 : vector<32x256xi32>
    %84 = arith.extui %83 : vector<32x256xi1> to vector<32x256xi32>
    %85 = arith.sitofp %84 : vector<32x256xi32> to vector<32x256xf32>
    %86 = arith.truncf %85 : vector<32x256xf32> to vector<32x256xbf16>
    %cst_27 = arith.constant dense<0.000000e+00> : vector<32x32xf32>
    %87 = tpu.matmul %86, %4, %cst_27 {dimension_numbers = #tpu.dot_dimension_numbers<[1], [0], [0], [1], [0, 0, 1, 1], [], []>} : vector<32x256xbf16>, vector<256x32xbf16>, vector<32x32xf32> -> vector<32x32xf32>
    %88 = arith.mulf %87, %17 : vector<32x32xf32>
    %cst_28 = arith.constant dense<0.000000e+00> : vector<32xf32>
    %89 = vector.multi_reduction <add>, %88, %cst_28 [1] : vector<32x32xf32> to vector<32xf32>
    %90 = vector.shape_cast %89 : vector<32xf32> to vector<32x1xf32>
    %cst_29 = arith.constant 0.000000e+00 : f32
    %91 = vector.broadcast %cst_29 : f32 to vector<32x1xf32>
    %92 = arith.subf %91, %90 : vector<32x1xf32>
    %cst_30 = arith.constant 0.000000e+00 : f32
    %93 = vector.broadcast %cst_30 : f32 to vector<32x1xf32>
    %94 = arith.minimumf %92, %93 : vector<32x1xf32>
    %95 = math.absf %92 : vector<32x1xf32>
    %cst_31 = arith.constant 0.000000e+00 : f32
    %96 = vector.broadcast %cst_31 : f32 to vector<32x1xf32>
    %97 = arith.subf %96, %95 : vector<32x1xf32>
    %98 = math.exp %97 : vector<32x1xf32>
    %99 = math.log1p %98 : vector<32x1xf32>
    %100 = arith.subf %94, %99 : vector<32x1xf32>
    %101 = arith.addf %79, %100 : vector<32x1xf32>
    %102 = vector.extract_strided_slice %10 {offsets = [0, 3], sizes = [32, 1], strides = [1, 1]} : vector<32x5xi32> to vector<32x1xi32>
    %103 = tpu.iota {dimensions = array<i32: 1>} : vector<32x256xi32>
    %104 = vector.broadcast %102 : vector<32x1xi32> to vector<32x256xi32>
    %105 = arith.cmpi eq, %103, %104 : vector<32x256xi32>
    %106 = arith.extui %105 : vector<32x256xi1> to vector<32x256xi32>
    %107 = arith.sitofp %106 : vector<32x256xi32> to vector<32x256xf32>
    %108 = arith.truncf %107 : vector<32x256xf32> to vector<32x256xbf16>
    %cst_32 = arith.constant dense<0.000000e+00> : vector<32x32xf32>
    %109 = tpu.matmul %108, %4, %cst_32 {dimension_numbers = #tpu.dot_dimension_numbers<[1], [0], [0], [1], [0, 0, 1, 1], [], []>} : vector<32x256xbf16>, vector<256x32xbf16>, vector<32x32xf32> -> vector<32x32xf32>
    %110 = arith.mulf %109, %17 : vector<32x32xf32>
    %cst_33 = arith.constant dense<0.000000e+00> : vector<32xf32>
    %111 = vector.multi_reduction <add>, %110, %cst_33 [1] : vector<32x32xf32> to vector<32xf32>
    %112 = vector.shape_cast %111 : vector<32xf32> to vector<32x1xf32>
    %cst_34 = arith.constant 0.000000e+00 : f32
    %113 = vector.broadcast %cst_34 : f32 to vector<32x1xf32>
    %114 = arith.subf %113, %112 : vector<32x1xf32>
    %cst_35 = arith.constant 0.000000e+00 : f32
    %115 = vector.broadcast %cst_35 : f32 to vector<32x1xf32>
    %116 = arith.minimumf %114, %115 : vector<32x1xf32>
    %117 = math.absf %114 : vector<32x1xf32>
    %cst_36 = arith.constant 0.000000e+00 : f32
    %118 = vector.broadcast %cst_36 : f32 to vector<32x1xf32>
    %119 = arith.subf %118, %117 : vector<32x1xf32>
    %120 = math.exp %119 : vector<32x1xf32>
    %121 = math.log1p %120 : vector<32x1xf32>
    %122 = arith.subf %116, %121 : vector<32x1xf32>
    %123 = arith.addf %101, %122 : vector<32x1xf32>
    %124 = vector.extract_strided_slice %10 {offsets = [0, 4], sizes = [32, 1], strides = [1, 1]} : vector<32x5xi32> to vector<32x1xi32>
    %125 = tpu.iota {dimensions = array<i32: 1>} : vector<32x256xi32>
    %126 = vector.broadcast %124 : vector<32x1xi32> to vector<32x256xi32>
    %127 = arith.cmpi eq, %125, %126 : vector<32x256xi32>
    %128 = arith.extui %127 : vector<32x256xi1> to vector<32x256xi32>
    %129 = arith.sitofp %128 : vector<32x256xi32> to vector<32x256xf32>
    %130 = arith.truncf %129 : vector<32x256xf32> to vector<32x256xbf16>
    %cst_37 = arith.constant dense<0.000000e+00> : vector<32x32xf32>
    %131 = tpu.matmul %130, %4, %cst_37 {dimension_numbers = #tpu.dot_dimension_numbers<[1], [0], [0], [1], [0, 0, 1, 1], [], []>} : vector<32x256xbf16>, vector<256x32xbf16>, vector<32x32xf32> -> vector<32x32xf32>
    %132 = arith.mulf %131, %17 : vector<32x32xf32>
    %cst_38 = arith.constant dense<0.000000e+00> : vector<32xf32>
    %133 = vector.multi_reduction <add>, %132, %cst_38 [1] : vector<32x32xf32> to vector<32xf32>
    %134 = vector.shape_cast %133 : vector<32xf32> to vector<32x1xf32>
    %cst_39 = arith.constant 0.000000e+00 : f32
    %135 = vector.broadcast %cst_39 : f32 to vector<32x1xf32>
    %136 = arith.subf %135, %134 : vector<32x1xf32>
    %cst_40 = arith.constant 0.000000e+00 : f32
    %137 = vector.broadcast %cst_40 : f32 to vector<32x1xf32>
    %138 = arith.minimumf %136, %137 : vector<32x1xf32>
    %139 = math.absf %136 : vector<32x1xf32>
    %cst_41 = arith.constant 0.000000e+00 : f32
    %140 = vector.broadcast %cst_41 : f32 to vector<32x1xf32>
    %141 = arith.subf %140, %139 : vector<32x1xf32>
    %142 = math.exp %141 : vector<32x1xf32>
    %143 = math.log1p %142 : vector<32x1xf32>
    %144 = arith.subf %138, %143 : vector<32x1xf32>
    %145 = arith.addf %123, %144 : vector<32x1xf32>
    %c4_i32 = arith.constant 4 : i32
    %146 = arith.muli %arg0, %c4_i32 : i32
    %147 = arith.addi %146, %arg1 : i32
    %148 = tpu.iota {dimensions = array<i32: 0>} : vector<32x1xi32>
    %c32_i32 = arith.constant 32 : i32
    %149 = arith.muli %147, %c32_i32 : i32
    %150 = vector.broadcast %149 : i32 to vector<32x1xi32>
    %151 = arith.addi %148, %150 : vector<32x1xi32>
    %c200_i32 = arith.constant 200 : i32
    %152 = vector.broadcast %c200_i32 : i32 to vector<32x1xi32>
    %153 = arith.cmpi slt, %151, %152 : vector<32x1xi32>
    %154 = arith.extui %153 : vector<32x1xi1> to vector<32x1xi32>
    %155 = arith.sitofp %154 : vector<32x1xi32> to vector<32x1xf32>
    %156 = arith.mulf %145, %155 : vector<32x1xf32>
    %157 = vector.shape_cast %156 : vector<32x1xf32> to vector<1x32x1xf32>
    %cst_42 = arith.constant dense<0.000000e+00> : vector<1xf32>
    %158 = vector.multi_reduction <add>, %157, %cst_42 [1, 2] : vector<1x32x1xf32> to vector<1xf32>
    %159 = vector.shape_cast %158 : vector<1xf32> to vector<1x1x1xf32>
    %160 = vector.extract %159[0, 0, 0] : f32 from vector<1x1x1xf32>
    %c0_43 = arith.constant 0 : index
    %c0_44 = arith.constant 0 : index
    %161 = vector.load %arg8[%c0_43, %c0_44] : memref<1x1xf32, #tpu.memory_space<vmem>>, vector<1x1xf32>
    %cst_45 = arith.constant 0.000000e+00 : f32
    %162 = arith.subf %cst_45, %160 : f32
    %163 = vector.broadcast %162 : f32 to vector<1x1xf32>
    %164 = arith.addf %161, %163 : vector<1x1xf32>
    %c0_46 = arith.constant 0 : index
    %c0_47 = arith.constant 0 : index
    %165 = vector.load %arg8[%c0_46, %c0_47] : memref<1x1xf32, #tpu.memory_space<vmem>>, vector<1x1xf32>
    tpu.vector_store %arg8[%c0_46, %c0_47], %164 {strides = array<i32>} : memref<1x1xf32, #tpu.memory_space<vmem>>, vector<1x1xf32>,
    %c3_i32 = arith.constant 3 : i32
    %166 = arith.cmpi eq, %arg1, %c3_i32 : i32
    %167 = arith.extui %166 : i1 to i32
    %c0_i32_48 = arith.constant 0 : i32
    %168 = arith.cmpi ne, %167, %c0_i32_48 : i32
    scf.if %168 {
      %c0_49 = arith.constant 0 : index
      %c0_50 = arith.constant 0 : index
      %169 = vector.load %arg8[%c0_49, %c0_50] : memref<1x1xf32, #tpu.memory_space<vmem>>, vector<1x1xf32>
      %c0_51 = arith.constant 0 : index
      %c0_52 = arith.constant 0 : index
      %c0_53 = arith.constant 0 : index
      %170 = vector.load %arg7[%c0_51, %c0_52, %c0_53] : memref<1x1x1xf32, #tpu.memory_space<vmem>>, vector<1x1x1xf32>
      %171 = vector.shape_cast %170 : vector<1x1x1xf32> to vector<1x1xf32>
      %172 = vector.shape_cast %169 : vector<1x1xf32> to vector<1x1x1xf32>
      tpu.vector_store %arg7[%c0_51, %c0_52, %c0_53], %172 {strides = array<i32>} : memref<1x1x1xf32, #tpu.memory_space<vmem>>, vector<1x1x1xf32>,
    } else {
    }
    return
  }
  func.func @transform_0(%arg0: i32, %arg1: i32) -> (i32, i32, i32) {
    %c4_i32 = arith.constant 4 : i32
    %0 = arith.muli %arg0, %c4_i32 : i32
    %1 = arith.addi %0, %arg1 : i32
    %c0_i32 = arith.constant 0 : i32
    %c0_i32_0 = arith.constant 0 : i32
    %c0_i32_1 = arith.constant 0 : i32
    return %1, %c0_i32, %c0_i32_0 : i32, i32, i32
  }
  func.func @transform_1(%arg0: i32, %arg1: i32) -> (i32, i32, i32) {
    %c4_i32 = arith.constant 4 : i32
    %0 = arith.muli %arg0, %c4_i32 : i32
    %1 = arith.addi %0, %arg1 : i32
    %c0_i32 = arith.constant 0 : i32
    %c0_i32_0 = arith.constant 0 : i32
    %c0_i32_1 = arith.constant 0 : i32
    return %1, %c0_i32, %c0_i32_0 : i32, i32, i32
  }
  func.func @transform_2(%arg0: i32, %arg1: i32) -> (i32, i32, i32) {
    %c4_i32 = arith.constant 4 : i32
    %0 = arith.muli %arg0, %c4_i32 : i32
    %1 = arith.addi %0, %arg1 : i32
    %c0_i32 = arith.constant 0 : i32
    %c0_i32_0 = arith.constant 0 : i32
    %c0_i32_1 = arith.constant 0 : i32
    return %1, %c0_i32, %c0_i32_0 : i32, i32, i32
  }
  func.func @transform_3(%arg0: i32, %arg1: i32) -> (i32, i32) {
    %c0_i32 = arith.constant 0 : i32
    %c0_i32_0 = arith.constant 0 : i32
    %c0_i32_1 = arith.constant 0 : i32
    return %c0_i32, %c0_i32_0 : i32, i32
  }
  func.func @transform_4(%arg0: i32, %arg1: i32) -> (i32, i32) {
    %c0_i32 = arith.constant 0 : i32
    %c0_i32_0 = arith.constant 0 : i32
    %c0_i32_1 = arith.constant 0 : i32
    return %c0_i32, %c0_i32_0 : i32, i32
  }
  func.func @transform_5(%arg0: i32, %arg1: i32) -> (i32, i32, i32) {
    %c0_i32 = arith.constant 0 : i32
    %c0_i32_0 = arith.constant 0 : i32
    %c0_i32_1 = arith.constant 0 : i32
    return %arg0, %c0_i32, %c0_i32_0 : i32, i32, i32
  }
}

</mosaic_0001>

<llo_original>
// kernel: tpu_custom_call.1
$region0: #{tpu_custom_call.1}
  #allocation0 [shape = 'u32[]', space=smem, size = 0x4, offset = 0x4, fixed_abs, tag = 'smem constant byte address 0x4 - core index']
  #allocation1 [shape = 'u32[144,128]{1,0:T(1,128)}', space=vmem, size = 0x12000, scoped, tag = 'internal scratch']
  #allocation2 [shape = 'f32[1,1]{1,0:T(1,128)}', space=vmem, size = 0x200, scoped, tag = 'scratch operand']
  %s0 = inlined_call_operand.vmem [shape: s32[8,32,1], index: 0, kind: input, shape index: {}]
  %s1 = inlined_call_operand.vmem [shape: s32[8,32,1], index: 1, kind: input, shape index: {}]
  %s2 = inlined_call_operand.vmem [shape: s32[8,32,5], index: 2, kind: input, shape index: {}]
  %s3 = inlined_call_operand.vmem [shape: bf16[256,32], index: 3, kind: input, shape index: {}]
  %s4 = inlined_call_operand.vmem [shape: bf16[256,32], index: 4, kind: input, shape index: {}]
  %s5 = inlined_call_operand.vmem [shape: f32[2,1,1], index: 5, kind: output, shape index: {}]
  %s6 = sld [smem:[#allocation0]]
  $region61: #{tpu_custom_call.1} parent=0
    _
  %s8 = ssub.s32 1, %s6
  %s9 = scalar_select 0, %s8, %s6
  loop: start=0, step=1, limit=10
  $region2: #{tpu_custom_call.1} parent=0 // loop_pre_header
    _
  $region3: #{tpu_custom_call.1} parent=0 // loop_header
    %s11 = sphi 0, %s15
    %p12 = scmp.ge.s32.totalorder %s11, 10
    %s18 = sphi 0, %s30
    %s19 = sphi 0, %s26
    %s20 = sphi 0, %s18
    %s21 = sphi 0, %s19
    %s22 = sphi 0, %s20
    %s23 = sphi 0, %s21
    %s37 = sphi 0, %s39
    %s40 = sphi 0, %s37
    %s41 = sphi 0, %s40
    %s57 = sphi 0, %s41
    %s67 = sphi 0, %s69
    %s70 = sphi 0, %s67
    %s71 = sphi 0, %s70
    %s87 = sphi 0, %s71
    %s97 = sphi 0, %s99
    %s100 = sphi 0, %s97
    %s101 = sphi 0, %s100
    %s117 = sphi 0, %s101
    %s121 = sphi 0, %s121
    %s123 = sphi 0, %s121
    %s124 = sphi 0, %s123
    %s138 = sphi 0, %s124
    %s142 = sphi 0, %s142
    %s144 = sphi 0, %s142
    %s145 = sphi 0, %s144
    %s159 = sphi 0, %s145
    %s165 = sphi 0, %s167
    %s168 = sphi 0, %s165
    %s169 = sphi 0, %s168
    %s185 = sphi 0, %s169
  $region4: #{tpu_custom_call.1} parent=0 // loop_header_branch
    %14 = sbr.rel (%p12) target = $region8
  $region5: #{tpu_custom_call.1} parent=0 // loop_body
    %s16 = ssub.s32 %s11, 1
    %s17 = ssub.s32 %s11, 2
    %s24 = sadd.s32 1, %s19
    %p25 = scmp.ge.s32.totalorder %s24, 4
    %s26 = scalar_select %p25, 0, %s24
    %s27 = sadd.s32 1, %s18
    %s28 = scalar_select %p25, %s27, %s18
    %p29 = scmp.ge.s32.totalorder %s28, 2
    %s30 = scalar_select %p29, 0, %s28
    %s31 = smul.u32 %s18, 4
    %s32 = sadd.s32 %s31, %s19
    %s33 = smul.u32 %s30, 4
    %s34 = sadd.s32 %s33, %s26
    %s35 = ssub.s32 %s32, %s34
    %p36 = scmp.eq.s32.totalorder %s35, 0
    %s38 = sadd.s32 %s37, 1
    %s39 = scalar_select %p36, %s37, %s38
    %p42 = pneg %p36
    %p43 = scmp.eq.s32.totalorder %s11, 7
    %p44 = por %p42, %p43
    %p45 = scmp.ne.s32.totalorder %s37, %s40
    %p46 = scmp.eq.s32.totalorder %s11, 0
    %p47 = por %p45, %p46
    %p48 = scmp.ne.s32.totalorder %s37, %s40
    %p49 = scmp.eq.s32.totalorder %s16, 7
    %p50 = por %p48, %p49
    %p51 = scmp.ne.s32.totalorder %s40, %s41
    %p52 = scmp.eq.s32.totalorder %s16, 0
    %p53 = por %p51, %p52
    %p54 = scmp.ne.s32.totalorder %s40, %s41
    %p55 = scmp.eq.s32.totalorder %s17, 7
    %p56 = por %p54, %p55
    %p58 = scmp.ne.s32.totalorder %s41, %s57
    %p59 = scmp.eq.s32.totalorder %s17, 0
    %p60 = por %p58, %p59
    %s61 = smul.u32 %s18, 4
    %s62 = sadd.s32 %s61, %s19
    %s63 = smul.u32 %s30, 4
    %s64 = sadd.s32 %s63, %s26
    %s65 = ssub.s32 %s62, %s64
    %p66 = scmp.eq.s32.totalorder %s65, 0
    %s68 = sadd.s32 %s67, 1
    %s69 = scalar_select %p66, %s67, %s68
    %p72 = pneg %p66
    %p73 = scmp.eq.s32.totalorder %s11, 7
    %p74 = por %p72, %p73
    %p75 = scmp.ne.s32.totalorder %s67, %s70
    %p76 = scmp.eq.s32.totalorder %s11, 0
    %p77 = por %p75, %p76
    %p78 = scmp.ne.s32.totalorder %s67, %s70
    %p79 = scmp.eq.s32.totalorder %s16, 7
    %p80 = por %p78, %p79
    %p81 = scmp.ne.s32.totalorder %s70, %s71
    %p82 = scmp.eq.s32.totalorder %s16, 0
    %p83 = por %p81, %p82
    %p84 = scmp.ne.s32.totalorder %s70, %s71
    %p85 = scmp.eq.s32.totalorder %s17, 7
    %p86 = por %p84, %p85
    %p88 = scmp.ne.s32.totalorder %s71, %s87
    %p89 = scmp.eq.s32.totalorder %s17, 0
    %p90 = por %p88, %p89
    %s91 = smul.u32 %s18, 4
    %s92 = sadd.s32 %s91, %s19
    %s93 = smul.u32 %s30, 4
    %s94 = sadd.s32 %s93, %s26
    %s95 = ssub.s32 %s92, %s94
    %p96 = scmp.eq.s32.totalorder %s95, 0
    %s98 = sadd.s32 %s97, 1
    %s99 = scalar_select %p96, %s97, %s98
    %p102 = pneg %p96
    %p103 = scmp.eq.s32.totalorder %s11, 7
    %p104 = por %p102, %p103
    %p105 = scmp.ne.s32.totalorder %s97, %s100
    %p106 = scmp.eq.s32.totalorder %s11, 0
    %p107 = por %p105, %p106
    %p108 = scmp.ne.s32.totalorder %s97, %s100
    %p109 = scmp.eq.s32.totalorder %s16, 7
    %p110 = por %p108, %p109
    %p111 = scmp.ne.s32.totalorder %s100, %s101
    %p112 = scmp.eq.s32.totalorder %s16, 0
    %p113 = por %p111, %p112
    %p114 = scmp.ne.s32.totalorder %s100, %s101
    %p115 = scmp.eq.s32.totalorder %s17, 7
    %p116 = por %p114, %p115
    %p118 = scmp.ne.s32.totalorder %s101, %s117
    %p119 = scmp.eq.s32.totalorder %s17, 0
    %p120 = por %p118, %p119
    %s122 = sadd.s32 %s121, 1
    %p125 = scmp.eq.s32.totalorder %s11, 7
    %p126 = scmp.ne.s32.totalorder %s121, %s123
    %p127 = scmp.eq.s32.totalorder %s11, 0
    %p128 = por %p126, %p127
    %p129 = scmp.ne.s32.totalorder %s121, %s123
    %p130 = scmp.eq.s32.totalorder %s16, 7
    %p131 = por %p129, %p130
    %p132 = scmp.ne.s32.totalorder %s123, %s124
    %p133 = scmp.eq.s32.totalorder %s16, 0
    %p134 = por %p132, %p133
    %p135 = scmp.ne.s32.totalorder %s123, %s124
    %p136 = scmp.eq.s32.totalorder %s17, 7
    %p137 = por %p135, %p136
    %p139 = scmp.ne.s32.totalorder %s124, %s138
    %p140 = scmp.eq.s32.totalorder %s17, 0
    %p141 = por %p139, %p140
    %s143 = sadd.s32 %s142, 1
    %p146 = scmp.eq.s32.totalorder %s11, 7
    %p147 = scmp.ne.s32.totalorder %s142, %s144
    %p148 = scmp.eq.s32.totalorder %s11, 0
    %p149 = por %p147, %p148
    %p150 = scmp.ne.s32.totalorder %s142, %s144
    %p151 = scmp.eq.s32.totalorder %s16, 7
    %p152 = por %p150, %p151
    %p153 = scmp.ne.s32.totalorder %s144, %s145
    %p154 = scmp.eq.s32.totalorder %s16, 0
    %p155 = por %p153, %p154
    %p156 = scmp.ne.s32.totalorder %s144, %s145
    %p157 = scmp.eq.s32.totalorder %s17, 7
    %p158 = por %p156, %p157
    %p160 = scmp.ne.s32.totalorder %s145, %s159
    %p161 = scmp.eq.s32.totalorder %s17, 0
    %p162 = por %p160, %p161
    %s163 = ssub.s32 %s18, %s30
    %p164 = scmp.eq.s32.totalorder %s163, 0
    %s166 = sadd.s32 %s165, 1
    %s167 = scalar_select %p164, %s165, %s166
    %p170 = pneg %p164
    %p171 = scmp.eq.s32.totalorder %s11, 7
    %p172 = por %p170, %p171
    %p173 = scmp.ne.s32.totalorder %s165, %s168
    %p174 = scmp.eq.s32.totalorder %s11, 0
    %p175 = por %p173, %p174
    %p176 = scmp.ne.s32.totalorder %s165, %s168
    %p177 = scmp.eq.s32.totalorder %s16, 7
    %p178 = por %p176, %p177
    %p179 = scmp.ne.s32.totalorder %s168, %s169
    %p180 = scmp.eq.s32.totalorder %s16, 0
    %p181 = por %p179, %p180
    %p182 = scmp.ne.s32.totalorder %s168, %s169
    %p183 = scmp.eq.s32.totalorder %s17, 7
    %p184 = por %p182, %p183
    %p186 = scmp.ne.s32.totalorder %s169, %s185
    %p187 = scmp.eq.s32.totalorder %s17, 0
    %p188 = por %p186, %p187
    %p189 = scmp.le.s32.totalorder 1, %s11
    %p190 = scmp.lt.s32.totalorder %s11, 9
    %p191 = pnand %p189, %p190
    %p192 = pneg %p191
    // Predicated region
    $region9: #{tpu_custom_call.1} parent=5 // pred_check
      _
    $region10: #{tpu_custom_call.1} parent=5 // pred_check_branch
      %194 = sbr.rel (%p191) target = $region12
    $region11: #{tpu_custom_call.1} parent=5 // pred_region
      %s195 = ssub.s32 %s11, 1
      // Predicated region
      $region13: #{tpu_custom_call.1} parent=11 // pred_check
        %p196 = pneg %p134
      $region14: #{tpu_custom_call.1} parent=11 // pred_check_branch
        %198 = sbr.rel (%p196) target = $region16
      $region15: #{tpu_custom_call.1} parent=11 // pred_region
        _
      $region16: #{tpu_custom_call.1} parent=11 // pred_fallthru
        _
      // Predicated region
      $region17: #{tpu_custom_call.1} parent=11 // pred_check
        %p199 = pneg %p155
      $region18: #{tpu_custom_call.1} parent=11 // pred_check_branch
        %201 = sbr.rel (%p199) target = $region20
      $region19: #{tpu_custom_call.1} parent=11 // pred_region
        _
      $region20: #{tpu_custom_call.1} parent=11 // pred_fallthru
        _
    $region12: #{tpu_custom_call.1} parent=5 // pred_fallthru
      _
    %p202 = scmp.lt.s32.totalorder %s11, 8
    // Predicated region
    $region21: #{tpu_custom_call.1} parent=5 // pred_check
      %p203 = pneg %p202
    $region22: #{tpu_custom_call.1} parent=5 // pred_check_branch
      %205 = sbr.rel (%p203) target = $region24
    $region23: #{tpu_custom_call.1} parent=5 // pred_region
      // Predicated region
      $region25: #{tpu_custom_call.1} parent=23 // pred_check
        %p206 = pneg %p47
      $region26: #{tpu_custom_call.1} parent=23 // pred_check_branch
        %208 = sbr.rel (%p206) target = $region28
      $region27: #{tpu_custom_call.1} parent=23 // pred_region
        %s209 = smul.u32 %s18, 4
        %s210 = sadd.s32 %s209, %s19
        %p211 = scmp.lt.s32.totalorder %s210, 7
        %s212 = scalar_select %p211, %s210, 7
        %s213 = smul.addr %s212, 4
        %s214 = smul.addr %s213, 8
        %s215 = scalar_lea.vmem %s0, %s214
        %s216 = smul.u32 %s18, 4
        %s217 = sadd.s32 %s216, %s19
      $region28: #{tpu_custom_call.1} parent=23 // pred_fallthru
        _
      // Predicated region
      $region29: #{tpu_custom_call.1} parent=23 // pred_check
        %p218 = pneg %p77
      $region30: #{tpu_custom_call.1} parent=23 // pred_check_branch
        %220 = sbr.rel (%p218) target = $region32
      $region31: #{tpu_custom_call.1} parent=23 // pred_region
        %s221 = smul.u32 %s18, 4
        %s222 = sadd.s32 %s221, %s19
        %p223 = scmp.lt.s32.totalorder %s222, 7
        %s224 = scalar_select %p223, %s222, 7
        %s225 = smul.addr %s224, 4
        %s226 = smul.addr %s225, 8
        %s227 = scalar_lea.vmem %s1, %s226
        %s228 = smul.u32 %s18, 4
        %s229 = sadd.s32 %s228, %s19
      $region32: #{tpu_custom_call.1} parent=23 // pred_fallthru
        _
      // Predicated region
      $region33: #{tpu_custom_call.1} parent=23 // pred_check
        %p230 = pneg %p107
      $region34: #{tpu_custom_call.1} parent=23 // pred_check_branch
        %232 = sbr.rel (%p230) target = $region36
      $region35: #{tpu_custom_call.1} parent=23 // pred_region
        %s233 = smul.u32 %s18, 4
        %s234 = sadd.s32 %s233, %s19
        %p235 = scmp.lt.s32.totalorder %s234, 7
        %s236 = scalar_select %p235, %s234, 7
        %s237 = smul.addr %s236, 4
        %s238 = smul.addr %s237, 8
        %s239 = scalar_lea.vmem %s2, %s238
        %s240 = smul.u32 %s18, 4
        %s241 = sadd.s32 %s240, %s19
      $region36: #{tpu_custom_call.1} parent=23 // pred_fallthru
        _
    $region24: #{tpu_custom_call.1} parent=5 // pred_fallthru
      _
    %p242 = scmp.le.s32.totalorder 1, %s11
    %p243 = scmp.lt.s32.totalorder %s11, 9
    %p244 = pnand %p242, %p243
    %p245 = pneg %p244
    // Predicated region
    $region37: #{tpu_custom_call.1} parent=5 // pred_check
      _
    $region38: #{tpu_custom_call.1} parent=5 // pred_check_branch
      %247 = sbr.rel (%p244) target = $region40
    $region39: #{tpu_custom_call.1} parent=5 // pred_region
      %s248 = ssub.s32 %s11, 1
      %s249 = smul.u32 %s20, 4
      %s250 = sadd.s32 %s249, %s21
      %p251 = scmp.lt.s32.totalorder %s250, 7
      %s252 = scalar_select %p251, %s250, 7
      %s253 = smul.addr %s252, 4
      %s254 = smul.addr %s253, 8
      %s255 = scalar_lea.vmem %s0, %s254
      %p256 = pneg %p53
      %p257 = pneg %p50
      %s258 = smul.u32 %s20, 4
      %s259 = sadd.s32 %s258, %s21
      %p260 = scmp.lt.s32.totalorder %s259, 7
      %s261 = scalar_select %p260, %s259, 7
      %s262 = smul.addr %s261, 4
      %s263 = smul.addr %s262, 8
      %s264 = scalar_lea.vmem %s1, %s263
      %p265 = pneg %p83
      %p266 = pneg %p80
      %s267 = smul.u32 %s20, 4
      %s268 = sadd.s32 %s267, %s21
      %p269 = scmp.lt.s32.totalorder %s268, 7
      %s270 = scalar_select %p269, %s268, 7
      %s271 = smul.addr %s270, 4
      %s272 = smul.addr %s271, 8
      %s273 = scalar_lea.vmem %s2, %s272
      %p274 = pneg %p113
      %p275 = pneg %p110
      %p276 = pneg %p134
      %p277 = pneg %p131
      %p278 = pneg %p155
      %p279 = pneg %p152
      %p280 = pneg %p181
      %p281 = pneg %p178
      %p282 = scmp.lt.s32.totalorder %s20, 1
      %s283 = scalar_select %p282, %s20, 1
      %s284 = scalar_lea.vmem %s5, %s283
      %s285 = smul.u32 %s20, 4
      %s286 = sadd.s32 %s285, %s21
      %p287 = scmp.lt.s32.totalorder %s286, 7
      %s288 = scalar_select %p287, %s286, 7
      %s289 = smul.addr %s288, 4
      %s290 = smul.addr %s289, 8
      %s291 = scalar_lea.vmem %s0, %s290
      %s292 = smul.u32 %s20, 4
      %s293 = sadd.s32 %s292, %s21
      %s294 = smul.u32 %s20, 4
      %s295 = sadd.s32 %s294, %s21
      %p296 = scmp.lt.s32.totalorder %s295, 7
      %s297 = scalar_select %p296, %s295, 7
      %s298 = smul.addr %s297, 4
      %s299 = smul.addr %s298, 8
      %s300 = scalar_lea.vmem %s1, %s299
      %s301 = smul.u32 %s20, 4
      %s302 = sadd.s32 %s301, %s21
      %s303 = smul.u32 %s20, 4
      %s304 = sadd.s32 %s303, %s21
      %p305 = scmp.lt.s32.totalorder %s304, 7
      %s306 = scalar_select %p305, %s304, 7
      %s307 = smul.addr %s306, 4
      %s308 = smul.addr %s307, 8
      %s309 = scalar_lea.vmem %s2, %s308
      %s310 = smul.u32 %s20, 4
      %s311 = sadd.s32 %s310, %s21
      %p312 = scmp.lt.s32.totalorder %s20, 1
      %s313 = scalar_select %p312, %s20, 1
      %s314 = scalar_lea.vmem %s5, %s313
      %p316 = scmp.eq.s32.totalorder %s21, 0
      // Predicated region
      $region41: #{tpu_custom_call.1} parent=39 // pred_check
        %p317 = pneg %p316
      $region42: #{tpu_custom_call.1} parent=39 // pred_check_branch
        %319 = sbr.rel (%p317) target = $region44
      $region43: #{tpu_custom_call.1} parent=39 // pred_region
        %vm320 = vcmask 0
        %321 = vst.msk [vmem:[#allocation2] sm:$0x1] %vm320, 0.0
      $region44: #{tpu_custom_call.1} parent=39 // pred_fallthru
        _
      %v322 = vld [vmem:[%s3] sm:$0xf]
      %v323 = vld [vmem:[%s3 + $0x4] sm:$0xf]
      %v324 = vld [vmem:[%s3 + $0x8] sm:$0xf]
      %v325 = vld [vmem:[%s3 + $0xc] sm:$0xf]
      %v326 = vld [vmem:[%s3 + $0x10] sm:$0xf]
      %v327 = vld [vmem:[%s3 + $0x14] sm:$0xf]
      %v328 = vld [vmem:[%s3 + $0x18] sm:$0xf]
      %v329 = vld [vmem:[%s3 + $0x1c] sm:$0xf]
      %v330 = vld [vmem:[%s3 + $0x20] sm:$0xf]
      %v331 = vld [vmem:[%s3 + $0x24] sm:$0xf]
      %v332 = vld [vmem:[%s3 + $0x28] sm:$0xf]
      %v333 = vld [vmem:[%s3 + $0x2c] sm:$0xf]
      %v334 = vld [vmem:[%s3 + $0x30] sm:$0xf]
      %v335 = vld [vmem:[%s3 + $0x34] sm:$0xf]
      %v336 = vld [vmem:[%s3 + $0x38] sm:$0xf]
      %v337 = vld [vmem:[%s3 + $0x3c] sm:$0xf]
      %v338 = vld [vmem:[%s3 + $0x40] sm:$0xf]
      %v339 = vld [vmem:[%s3 + $0x44] sm:$0xf]
      %v340 = vld [vmem:[%s3 + $0x48] sm:$0xf]
      %v341 = vld [vmem:[%s3 + $0x4c] sm:$0xf]
      %v342 = vld [vmem:[%s3 + $0x50] sm:$0xf]
      %v343 = vld [vmem:[%s3 + $0x54] sm:$0xf]
      %v344 = vld [vmem:[%s3 + $0x58] sm:$0xf]
      %v345 = vld [vmem:[%s3 + $0x5c] sm:$0xf]
      %v346 = vld [vmem:[%s3 + $0x60] sm:$0xf]
      %v347 = vld [vmem:[%s3 + $0x64] sm:$0xf]
      %v348 = vld [vmem:[%s3 + $0x68] sm:$0xf]
      %v349 = vld [vmem:[%s3 + $0x6c] sm:$0xf]
      %v350 = vld [vmem:[%s3 + $0x70] sm:$0xf]
      %v351 = vld [vmem:[%s3 + $0x74] sm:$0xf]
      %v352 = vld [vmem:[%s3 + $0x78] sm:$0xf]
      %v353 = vld [vmem:[%s3 + $0x7c] sm:$0xf]
      %v354 = vld [vmem:[%s4] sm:$0xf]
      %v355 = vld [vmem:[%s4 + $0x4] sm:$0xf]
      %v356 = vld [vmem:[%s4 + $0x8] sm:$0xf]
      %v357 = vld [vmem:[%s4 + $0xc] sm:$0xf]
      %v358 = vld [vmem:[%s4 + $0x10] sm:$0xf]
      %v359 = vld [vmem:[%s4 + $0x14] sm:$0xf]
      %v360 = vld [vmem:[%s4 + $0x18] sm:$0xf]
      %v361 = vld [vmem:[%s4 + $0x1c] sm:$0xf]
      %v362 = vld [vmem:[%s4 + $0x20] sm:$0xf]
      %v363 = vld [vmem:[%s4 + $0x24] sm:$0xf]
      %v364 = vld [vmem:[%s4 + $0x28] sm:$0xf]
      %v365 = vld [vmem:[%s4 + $0x2c] sm:$0xf]
      %v366 = vld [vmem:[%s4 + $0x30] sm:$0xf]
      %v367 = vld [vmem:[%s4 + $0x34] sm:$0xf]
      %v368 = vld [vmem:[%s4 + $0x38] sm:$0xf]
      %v369 = vld [vmem:[%s4 + $0x3c] sm:$0xf]
      %v370 = vld [vmem:[%s4 + $0x40] sm:$0xf]
      %v371 = vld [vmem:[%s4 + $0x44] sm:$0xf]
      %v372 = vld [vmem:[%s4 + $0x48] sm:$0xf]
      %v373 = vld [vmem:[%s4 + $0x4c] sm:$0xf]
      %v374 = vld [vmem:[%s4 + $0x50] sm:$0xf]
      %v375 = vld [vmem:[%s4 + $0x54] sm:$0xf]
      %v376 = vld [vmem:[%s4 + $0x58] sm:$0xf]
      %v377 = vld [vmem:[%s4 + $0x5c] sm:$0xf]
      %v378 = vld [vmem:[%s4 + $0x60] sm:$0xf]
      %v379 = vld [vmem:[%s4 + $0x64] sm:$0xf]
      %v380 = vld [vmem:[%s4 + $0x68] sm:$0xf]
      %v381 = vld [vmem:[%s4 + $0x6c] sm:$0xf]
      %v382 = vld [vmem:[%s4 + $0x70] sm:$0xf]
      %v383 = vld [vmem:[%s4 + $0x74] sm:$0xf]
      %v384 = vld [vmem:[%s4 + $0x78] sm:$0xf]
      %v385 = vld [vmem:[%s4 + $0x7c] sm:$0xf]
      %v386 = vld [vmem:[%s291] sm:$0xff]
      %v387 = vld [vmem:[%s291 + $0x8] sm:$0xff]
      %v388 = vld [vmem:[%s291 + $0x10] sm:$0xff]
      %v389 = vld [vmem:[%s291 + $0x18] sm:$0xff]
      %v390 = vld [vmem:[%s300] sm:$0xff]
      %v391 = vld [vmem:[%s300 + $0x8] sm:$0xff]
      %v392 = vld [vmem:[%s300 + $0x10] sm:$0xff]
      %v393 = vld [vmem:[%s300 + $0x18] sm:$0xff]
      %v394 = vld [vmem:[%s309] sm:$0xff]
      %v395 = vld [vmem:[%s309 + $0x8] sm:$0xff]
      %v396 = vld [vmem:[%s309 + $0x10] sm:$0xff]
      %v397 = vld [vmem:[%s309 + $0x18] sm:$0xff]
      %v398 = vlaneseq
      %v399 = vand.u32 %v398, 127
      %v400 = vadd.s32 %v399, 128
      %401 = vset.pattern.permute.xlu0 0
      %402 = vperm.xlu0 %401, %v386
      %v403 = vpop.permute.xlu0 %402
      %404 = vset.pattern.permute.xlu0 0
      %405 = vperm.xlu0 %404, %v387
      %v406 = vpop.permute.xlu0 %405
      %407 = vset.pattern.permute.xlu0 0
      %408 = vperm.xlu0 %407, %v388
      %v409 = vpop.permute.xlu0 %408
      %410 = vset.pattern.permute.xlu0 0
      %411 = vperm.xlu0 %410, %v389
      %v412 = vpop.permute.xlu0 %411
      %vm413 = vcmp.eq.s32.totalorder %v399, %v403
      %vm414 = vcmp.eq.s32.totalorder %v400, %v403
      %vm415 = vcmp.eq.s32.totalorder %v399, %v406
      %vm416 = vcmp.eq.s32.totalorder %v400, %v406
      %vm417 = vcmp.eq.s32.totalorder %v399, %v409
      %vm418 = vcmp.eq.s32.totalorder %v400, %v409
      %vm419 = vcmp.eq.s32.totalorder %v399, %v412
      %vm420 = vcmp.eq.s32.totalorder %v400, %v412
      %v421 = vsel %vm413, 1, 0
      %v422 = vsel %vm414, 1, 0
      %v423 = vsel %vm415, 1, 0
      %v424 = vsel %vm416, 1, 0
      %v425 = vsel %vm417, 1, 0
      %v426 = vsel %vm418, 1, 0
      %v427 = vsel %vm419, 1, 0
      %v428 = vsel %vm420, 1, 0
      %v429 = vcvt.s32.f32 %v421
      %v430 = vcvt.s32.f32 %v422
      %v431 = vcvt.s32.f32 %v423
      %v432 = vcvt.s32.f32 %v424
      %v433 = vcvt.s32.f32 %v425
      %v434 = vcvt.s32.f32 %v426
      %v435 = vcvt.s32.f32 %v427
      %v436 = vcvt.s32.f32 %v428
      %v437 = vpack.c.bf16 %v431, %v429
      %v438 = vpack.c.bf16 %v432, %v430
      %v439 = vpack.c.bf16 %v435, %v433
      %v440 = vpack.c.bf16 %v436, %v434
      %v473 = vunpack.c.l.b16 %v322
      %v474 = vunpack.c.l.b16 %v323
      %v475 = vunpack.c.l.b16 %v324
      %v476 = vunpack.c.l.b16 %v325
      %v477 = vunpack.c.l.b16 %v326
      %v478 = vunpack.c.l.b16 %v327
      %v479 = vunpack.c.l.b16 %v328
      %v480 = vunpack.c.l.b16 %v329
      %v481 = vunpack.c.l.b16 %v330
      %v482 = vunpack.c.l.b16 %v331
      %v483 = vunpack.c.l.b16 %v332
      %v484 = vunpack.c.l.b16 %v333
      %v485 = vunpack.c.l.b16 %v334
      %v486 = vunpack.c.l.b16 %v335
      %v487 = vunpack.c.l.b16 %v336
      %v488 = vunpack.c.l.b16 %v337
      %v489 = vunpack.c.l.b16 %v338
      %v490 = vunpack.c.l.b16 %v339
      %v491 = vunpack.c.l.b16 %v340
      %v492 = vunpack.c.l.b16 %v341
      %v493 = vunpack.c.l.b16 %v342
      %v494 = vunpack.c.l.b16 %v343
      %v495 = vunpack.c.l.b16 %v344
      %v496 = vunpack.c.l.b16 %v345
      %v497 = vunpack.c.l.b16 %v346
      %v498 = vunpack.c.l.b16 %v347
      %v499 = vunpack.c.l.b16 %v348
      %v500 = vunpack.c.l.b16 %v349
      %v501 = vunpack.c.l.b16 %v350
      %v502 = vunpack.c.l.b16 %v351
      %v503 = vunpack.c.l.b16 %v352
      %v504 = vunpack.c.l.b16 %v353
      %v505 = vpack.c.b16 %v474, %v473
      %v506 = vpack.c.b16 %v476, %v475
      %v507 = vpack.c.b16 %v478, %v477
      %v508 = vpack.c.b16 %v480, %v479
      %v509 = vpack.c.b16 %v482, %v481
      %v510 = vpack.c.b16 %v484, %v483
      %v511 = vpack.c.b16 %v486, %v485
      %v512 = vpack.c.b16 %v488, %v487
      %v513 = vpack.c.b16 %v490, %v489
      %v514 = vpack.c.b16 %v492, %v491
      %v515 = vpack.c.b16 %v494, %v493
      %v516 = vpack.c.b16 %v496, %v495
      %v517 = vpack.c.b16 %v498, %v497
      %v518 = vpack.c.b16 %v500, %v499
      %v519 = vpack.c.b16 %v502, %v501
      %v520 = vpack.c.b16 %v504, %v503
      %537 = vmatprep.subr.bf16.mxu0 0
      %538 = vmatpush1.bf16.msra.mxu0 %v512
      %539 = vmatprep.subr.bf16.mxu0 0
      %540 = vmatpush1.bf16.msra.mxu0 %v511
      %541 = vmatprep.subr.bf16.mxu0 0
      %542 = vmatpush1.bf16.msra.mxu0 %v510
      %543 = vmatprep.subr.bf16.mxu0 0
      %544 = vmatpush1.bf16.msra.mxu0 %v509
      %545 = vmatprep.subr.bf16.mxu0 0
      %546 = vmatpush1.bf16.msra.mxu0 %v508
      %547 = vmatprep.subr.bf16.mxu0 0
      %548 = vmatpush1.bf16.msra.mxu0 %v507
      %549 = vmatprep.subr.bf16.mxu0 0
      %550 = vmatpush1.bf16.msra.mxu0 %v506
      %551 = vmatprep.subr.bf16.mxu0 0
      %552 = vmatpush1.bf16.msra.mxu0 %v505
      %553 = vmatprep.subr.bf16.mxu0 0
      %554 = vmatpush2.bf16.msra.mxu0 %v520
      %555 = vmatprep.subr.bf16.mxu0 0
      %556 = vmatpush2.bf16.msra.mxu0 %v519
      %557 = vmatprep.subr.bf16.mxu0 0
      %558 = vmatpush2.bf16.msra.mxu0 %v518
      %559 = vmatprep.subr.bf16.mxu0 0
      %560 = vmatpush2.bf16.msra.mxu0 %v517
      %561 = vmatprep.subr.bf16.mxu0 0
      %562 = vmatpush2.bf16.msra.mxu0 %v516
      %563 = vmatprep.subr.bf16.mxu0 0
      %564 = vmatpush2.bf16.msra.mxu0 %v515
      %565 = vmatprep.subr.bf16.mxu0 0
      %566 = vmatpush2.bf16.msra.mxu0 %v514
      %567 = vmatprep.subr.bf16.mxu0 0
      %568 = vmatpush2.bf16.msra.mxu0 %v513
      %569 = vmatprep.mubr.bf16.mxu0 %v438
      %570 = vmatmul.mubr.bf16.gmra.mxu0 %v437
      %v571 = vpop.f32.mrf.mxu0
      %v572 = vadd.f32 0.0, %v571
      %v573 = vpop.f32.mrf.mxu0
      %v574 = vpop.f32.mrf.mxu0
      %v575 = vadd.f32 0.0, %v574
      %v576 = vpop.f32.mrf.mxu0
      %577 = vmatprep.mubr.bf16.mxu0 %v440
      %578 = vmatmul.mubr.bf16.gmra.mxu0 %v439
      %v579 = vpop.f32.mrf.mxu0
      %v580 = vadd.f32 0.0, %v579
      %v581 = vpop.f32.mrf.mxu0
      %v582 = vpop.f32.mrf.mxu0
      %v583 = vadd.f32 0.0, %v582
      %v584 = vpop.f32.mrf.mxu0
      %585 = vdwg.mxu0
      %586 = vset.pattern.permute.xlu0 0
      %587 = vperm.xlu0 %586, %v390
      %v588 = vpop.permute.xlu0 %587
      %589 = vset.pattern.permute.xlu0 0
      %590 = vperm.xlu0 %589, %v391
      %v591 = vpop.permute.xlu0 %590
      %592 = vset.pattern.permute.xlu0 0
      %593 = vperm.xlu0 %592, %v392
      %v594 = vpop.permute.xlu0 %593
      %595 = vset.pattern.permute.xlu0 0
      %596 = vperm.xlu0 %595, %v393
      %v597 = vpop.permute.xlu0 %596
      %vm598 = vcmp.eq.s32.totalorder %v399, %v588
      %vm599 = vcmp.eq.s32.totalorder %v400, %v588
      %vm600 = vcmp.eq.s32.totalorder %v399, %v591
      %vm601 = vcmp.eq.s32.totalorder %v400, %v591
      %vm602 = vcmp.eq.s32.totalorder %v399, %v594
      %vm603 = vcmp.eq.s32.totalorder %v400, %v594
      %vm604 = vcmp.eq.s32.totalorder %v399, %v597
      %vm605 = vcmp.eq.s32.totalorder %v400, %v597
      %v606 = vsel %vm598, 1, 0
      %v607 = vsel %vm599, 1, 0
      %v608 = vsel %vm600, 1, 0
      %v609 = vsel %vm601, 1, 0
      %v610 = vsel %vm602, 1, 0
      %v611 = vsel %vm603, 1, 0
      %v612 = vsel %vm604, 1, 0
      %v613 = vsel %vm605, 1, 0
      %v614 = vcvt.s32.f32 %v606
      %v615 = vcvt.s32.f32 %v607
      %v616 = vcvt.s32.f32 %v608
      %v617 = vcvt.s32.f32 %v609
      %v618 = vcvt.s32.f32 %v610
      %v619 = vcvt.s32.f32 %v611
      %v620 = vcvt.s32.f32 %v612
      %v621 = vcvt.s32.f32 %v613
      %v622 = vpack.c.bf16 %v616, %v614
      %v623 = vpack.c.bf16 %v617, %v615
      %v624 = vpack.c.bf16 %v620, %v618
      %v625 = vpack.c.bf16 %v621, %v619
      %v658 = vunpack.c.l.b16 %v354
      %v659 = vunpack.c.l.b16 %v355
      %v660 = vunpack.c.l.b16 %v356
      %v661 = vunpack.c.l.b16 %v357
      %v662 = vunpack.c.l.b16 %v358
      %v663 = vunpack.c.l.b16 %v359
      %v664 = vunpack.c.l.b16 %v360
      %v665 = vunpack.c.l.b16 %v361
      %v666 = vunpack.c.l.b16 %v362
      %v667 = vunpack.c.l.b16 %v363
      %v668 = vunpack.c.l.b16 %v364
      %v669 = vunpack.c.l.b16 %v365
      %v670 = vunpack.c.l.b16 %v366
      %v671 = vunpack.c.l.b16 %v367
      %v672 = vunpack.c.l.b16 %v368
      %v673 = vunpack.c.l.b16 %v369
      %v674 = vunpack.c.l.b16 %v370
      %v675 = vunpack.c.l.b16 %v371
      %v676 = vunpack.c.l.b16 %v372
      %v677 = vunpack.c.l.b16 %v373
      %v678 = vunpack.c.l.b16 %v374
      %v679 = vunpack.c.l.b16 %v375
      %v680 = vunpack.c.l.b16 %v376
      %v681 = vunpack.c.l.b16 %v377
      %v682 = vunpack.c.l.b16 %v378
      %v683 = vunpack.c.l.b16 %v379
      %v684 = vunpack.c.l.b16 %v380
      %v685 = vunpack.c.l.b16 %v381
      %v686 = vunpack.c.l.b16 %v382
      %v687 = vunpack.c.l.b16 %v383
      %v688 = vunpack.c.l.b16 %v384
      %v689 = vunpack.c.l.b16 %v385
      %v690 = vpack.c.b16 %v659, %v658
      %v691 = vpack.c.b16 %v661, %v660
      %v692 = vpack.c.b16 %v663, %v662
      %v693 = vpack.c.b16 %v665, %v664
      %v694 = vpack.c.b16 %v667, %v666
      %v695 = vpack.c.b16 %v669, %v668
      %v696 = vpack.c.b16 %v671, %v670
      %v697 = vpack.c.b16 %v673, %v672
      %v698 = vpack.c.b16 %v675, %v674
      %v699 = vpack.c.b16 %v677, %v676
      %v700 = vpack.c.b16 %v679, %v678
      %v701 = vpack.c.b16 %v681, %v680
      %v702 = vpack.c.b16 %v683, %v682
      %v703 = vpack.c.b16 %v685, %v684
      %v704 = vpack.c.b16 %v687, %v686
      %v705 = vpack.c.b16 %v689, %v688
      %722 = vmatprep.subr.bf16.mxu0 0
      %723 = vmatpush1.bf16.msra.mxu0 %v697
      %724 = vmatprep.subr.bf16.mxu0 0
      %725 = vmatpush1.bf16.msra.mxu0 %v696
      %726 = vmatprep.subr.bf16.mxu0 0
      %727 = vmatpush1.bf16.msra.mxu0 %v695
      %728 = vmatprep.subr.bf16.mxu0 0
      %729 = vmatpush1.bf16.msra.mxu0 %v694
      %730 = vmatprep.subr.bf16.mxu0 0
      %731 = vmatpush1.bf16.msra.mxu0 %v693
      %732 = vmatprep.subr.bf16.mxu0 0
      %733 = vmatpush1.bf16.msra.mxu0 %v692
      %734 = vmatprep.subr.bf16.mxu0 0
      %735 = vmatpush1.bf16.msra.mxu0 %v691
      %736 = vmatprep.subr.bf16.mxu0 0
      %737 = vmatpush1.bf16.msra.mxu0 %v690
      %738 = vmatprep.subr.bf16.mxu0 0
      %739 = vmatpush2.bf16.msra.mxu0 %v705
      %740 = vmatprep.subr.bf16.mxu0 0
      %741 = vmatpush2.bf16.msra.mxu0 %v704
      %742 = vmatprep.subr.bf16.mxu0 0
      %743 = vmatpush2.bf16.msra.mxu0 %v703
      %744 = vmatprep.subr.bf16.mxu0 0
      %745 = vmatpush2.bf16.msra.mxu0 %v702
      %746 = vmatprep.subr.bf16.mxu0 0
      %747 = vmatpush2.bf16.msra.mxu0 %v701
      %748 = vmatprep.subr.bf16.mxu0 0
      %749 = vmatpush2.bf16.msra.mxu0 %v700
      %750 = vmatprep.subr.bf16.mxu0 0
      %751 = vmatpush2.bf16.msra.mxu0 %v699
      %752 = vmatprep.subr.bf16.mxu0 0
      %753 = vmatpush2.bf16.msra.mxu0 %v698
      %754 = vmatprep.mubr.bf16.mxu0 %v623
      %755 = vmatmul.mubr.bf16.gmra.mxu0 %v622
      %v756 = vpop.f32.mrf.mxu0
      %v757 = vadd.f32 0.0, %v756
      %v758 = vpop.f32.mrf.mxu0
      %v759 = vpop.f32.mrf.mxu0
      %v760 = vadd.f32 0.0, %v759
      %v761 = vpop.f32.mrf.mxu0
      %762 = vmatprep.mubr.bf16.mxu0 %v625
      %763 = vmatmul.mubr.bf16.gmra.mxu0 %v624
      %v764 = vpop.f32.mrf.mxu0
      %v765 = vadd.f32 0.0, %v764
      %v766 = vpop.f32.mrf.mxu0
      %v767 = vpop.f32.mrf.mxu0
      %v768 = vadd.f32 0.0, %v767
      %v769 = vpop.f32.mrf.mxu0
      %770 = vdwg.mxu0
      %v771 = vmul.f32 %v572, %v757
      %v772 = vmul.f32 %v575, %v760
      %v773 = vmul.f32 %v580, %v765
      %v774 = vmul.f32 %v583, %v768
      %vm775 = vcmask 261120
      %v776 = vsel %vm775, %v771, 0.0
      %777 = vadd.xlane.f32.xlu0 %v776
      %v778 = vpop.xlane.xlu0 %777
      %v779 = vsel %vm775, %v772, 0.0
      %780 = vadd.xlane.f32.xlu0 %v779
      %v781 = vpop.xlane.xlu0 %780
      %v782 = vsel %vm775, %v773, 0.0
      %783 = vadd.xlane.f32.xlu0 %v782
      %v784 = vpop.xlane.xlu0 %783
      %v785 = vsel %vm775, %v774, 0.0
      %786 = vadd.xlane.f32.xlu0 %v785
      %v787 = vpop.xlane.xlu0 %786
      %v788 = vmin.f32 %v778, 0.0
      %v789 = vmin.f32 %v781, 0.0
      %v790 = vmin.f32 %v784, 0.0
      %v791 = vmin.f32 %v787, 0.0
      %v792 = vand.u32 2147483647, %v778
      %v793 = vand.u32 2147483647, %v781
      %v794 = vand.u32 2147483647, %v784
      %v795 = vand.u32 2147483647, %v787
      %v796 = vsub.f32 0.0, %v792
      %v797 = vsub.f32 0.0, %v793
      %v798 = vsub.f32 0.0, %v794
      %v799 = vsub.f32 0.0, %v795
      %v800 = vmul.f32 %v796, 1.442695
      %v801 = vpow.pop %v800
      %v802 = vmul.f32 %v797, 1.442695
      %v803 = vpow.pop %v802
      %v804 = vmul.f32 %v798, 1.442695
      %v805 = vpow.pop %v804
      %v806 = vmul.f32 %v799, 1.442695
      %v807 = vpow.pop %v806
      %v808 = vadd.f32 %v801, 1.0
      %v809 = vlog2.pop %v808
      %v810 = vmul.f32 %v809, 0.6931472
      %v811 = vmul.f32 -0.5, %v801
      %v812 = vadd.f32 %v811, 1.0
      %v813 = vmul.f32 %v812, %v801
      %v814 = vand.u32 2147483647, %v801
      %vm815 = vcmp.lt.f32.partialorder %v814, 0.0004427343
      %v816 = vsel %vm815, %v813, %v810
      %v817 = vadd.f32 %v803, 1.0
      %v818 = vlog2.pop %v817
      %v819 = vmul.f32 %v818, 0.6931472
      %v820 = vmul.f32 -0.5, %v803
      %v821 = vadd.f32 %v820, 1.0
      %v822 = vmul.f32 %v821, %v803
      %v823 = vand.u32 2147483647, %v803
      %vm824 = vcmp.lt.f32.partialorder %v823, 0.0004427343
      %v825 = vsel %vm824, %v822, %v819
      %v826 = vadd.f32 %v805, 1.0
      %v827 = vlog2.pop %v826
      %v828 = vmul.f32 %v827, 0.6931472
      %v829 = vmul.f32 -0.5, %v805
      %v830 = vadd.f32 %v829, 1.0
      %v831 = vmul.f32 %v830, %v805
      %v832 = vand.u32 2147483647, %v805
      %vm833 = vcmp.lt.f32.partialorder %v832, 0.0004427343
      %v834 = vsel %vm833, %v831, %v828
      %v835 = vadd.f32 %v807, 1.0
      %v836 = vlog2.pop %v835
      %v837 = vmul.f32 %v836, 0.6931472
      %v838 = vmul.f32 -0.5, %v807
      %v839 = vadd.f32 %v838, 1.0
      %v840 = vmul.f32 %v839, %v807
      %v841 = vand.u32 2147483647, %v807
      %vm842 = vcmp.lt.f32.partialorder %v841, 0.0004427343
      %v843 = vsel %vm842, %v840, %v837
      %v844 = vsub.f32 %v788, %v816
      %v845 = vsub.f32 %v789, %v825
      %v846 = vsub.f32 %v790, %v834
      %v847 = vsub.f32 %v791, %v843
      %848 = vset.pattern.permute.xlu0 0
      %849 = vperm.xlu0 %848, %v394
      %v850 = vpop.permute.xlu0 %849
      %851 = vset.pattern.permute.xlu0 0
      %852 = vperm.xlu0 %851, %v395
      %v853 = vpop.permute.xlu0 %852
      %854 = vset.pattern.permute.xlu0 0
      %855 = vperm.xlu0 %854, %v396
      %v856 = vpop.permute.xlu0 %855
      %857 = vset.pattern.permute.xlu0 0
      %858 = vperm.xlu0 %857, %v397
      %v859 = vpop.permute.xlu0 %858
      %vm860 = vcmp.eq.s32.totalorder %v399, %v850
      %vm861 = vcmp.eq.s32.totalorder %v400, %v850
      %vm862 = vcmp.eq.s32.totalorder %v399, %v853
      %vm863 = vcmp.eq.s32.totalorder %v400, %v853
      %vm864 = vcmp.eq.s32.totalorder %v399, %v856
      %vm865 = vcmp.eq.s32.totalorder %v400, %v856
      %vm866 = vcmp.eq.s32.totalorder %v399, %v859
      %vm867 = vcmp.eq.s32.totalorder %v400, %v859
      %v868 = vsel %vm860, 1, 0
      %v869 = vsel %vm861, 1, 0
      %v870 = vsel %vm862, 1, 0
      %v871 = vsel %vm863, 1, 0
      %v872 = vsel %vm864, 1, 0
      %v873 = vsel %vm865, 1, 0
      %v874 = vsel %vm866, 1, 0
      %v875 = vsel %vm867, 1, 0
      %v876 = vcvt.s32.f32 %v868
      %v877 = vcvt.s32.f32 %v869
      %v878 = vcvt.s32.f32 %v870
      %v879 = vcvt.s32.f32 %v871
      %v880 = vcvt.s32.f32 %v872
      %v881 = vcvt.s32.f32 %v873
      %v882 = vcvt.s32.f32 %v874
      %v883 = vcvt.s32.f32 %v875
      %v884 = vpack.c.bf16 %v878, %v876
      %v885 = vpack.c.bf16 %v879, %v877
      %v886 = vpack.c.bf16 %v882, %v880
      %v887 = vpack.c.bf16 %v883, %v881
      %888 = vmatprep.subr.bf16.mxu0 0
      %889 = vmatpush1.bf16.msra.mxu0 %v697
      %890 = vmatprep.subr.bf16.mxu0 0
      %891 = vmatpush1.bf16.msra.mxu0 %v696
      %892 = vmatprep.subr.bf16.mxu0 0
      %893 = vmatpush1.bf16.msra.mxu0 %v695
      %894 = vmatprep.subr.bf16.mxu0 0
      %895 = vmatpush1.bf16.msra.mxu0 %v694
      %896 = vmatprep.subr.bf16.mxu0 0
      %897 = vmatpush1.bf16.msra.mxu0 %v693
      %898 = vmatprep.subr.bf16.mxu0 0
      %899 = vmatpush1.bf16.msra.mxu0 %v692
      %900 = vmatprep.subr.bf16.mxu0 0
      %901 = vmatpush1.bf16.msra.mxu0 %v691
      %902 = vmatprep.subr.bf16.mxu0 0
      %903 = vmatpush1.bf16.msra.mxu0 %v690
      %904 = vmatprep.subr.bf16.mxu0 0
      %905 = vmatpush2.bf16.msra.mxu0 %v705
      %906 = vmatprep.subr.bf16.mxu0 0
      %907 = vmatpush2.bf16.msra.mxu0 %v704
      %908 = vmatprep.subr.bf16.mxu0 0
      %909 = vmatpush2.bf16.msra.mxu0 %v703
      %910 = vmatprep.subr.bf16.mxu0 0
      %911 = vmatpush2.bf16.msra.mxu0 %v702
      %912 = vmatprep.subr.bf16.mxu0 0
      %913 = vmatpush2.bf16.msra.mxu0 %v701
      %914 = vmatprep.subr.bf16.mxu0 0
      %915 = vmatpush2.bf16.msra.mxu0 %v700
      %916 = vmatprep.subr.bf16.mxu0 0
      %917 = vmatpush2.bf16.msra.mxu0 %v699
      %918 = vmatprep.subr.bf16.mxu0 0
      %919 = vmatpush2.bf16.msra.mxu0 %v698
      %920 = vmatprep.mubr.bf16.mxu0 %v885
      %921 = vmatmul.mubr.bf16.gmra.mxu0 %v884
      %v922 = vpop.f32.mrf.mxu0
      %v923 = vadd.f32 0.0, %v922
      %v924 = vpop.f32.mrf.mxu0
      %v925 = vpop.f32.mrf.mxu0
      %v926 = vadd.f32 0.0, %v925
      %v927 = vpop.f32.mrf.mxu0
      %928 = vmatprep.mubr.bf16.mxu0 %v887
      %929 = vmatmul.mubr.bf16.gmra.mxu0 %v886
      %v930 = vpop.f32.mrf.mxu0
      %v931 = vadd.f32 0.0, %v930
      %v932 = vpop.f32.mrf.mxu0
      %v933 = vpop.f32.mrf.mxu0
      %v934 = vadd.f32 0.0, %v933
      %v935 = vpop.f32.mrf.mxu0
      %936 = vdwg.mxu0
      %v937 = vmul.f32 %v923, %v572
      %v938 = vmul.f32 %v926, %v575
      %v939 = vmul.f32 %v931, %v580
      %v940 = vmul.f32 %v934, %v583
      %v941 = vsel %vm775, %v937, 0.0
      %942 = vadd.xlane.f32.xlu0 %v941
      %v943 = vpop.xlane.xlu0 %942
      %v944 = vsel %vm775, %v938, 0.0
      %945 = vadd.xlane.f32.xlu0 %v944
      %v946 = vpop.xlane.xlu0 %945
      %v947 = vsel %vm775, %v939, 0.0
      %948 = vadd.xlane.f32.xlu0 %v947
      %v949 = vpop.xlane.xlu0 %948
      %v950 = vsel %vm775, %v940, 0.0
      %951 = vadd.xlane.f32.xlu0 %v950
      %v952 = vpop.xlane.xlu0 %951
      %v953 = vsub.f32 0.0, %v943
      %v954 = vsub.f32 0.0, %v946
      %v955 = vsub.f32 0.0, %v949
      %v956 = vsub.f32 0.0, %v952
      %v957 = vmin.f32 %v953, 0.0
      %v958 = vmin.f32 %v954, 0.0
      %v959 = vmin.f32 %v955, 0.0
      %v960 = vmin.f32 %v956, 0.0
      %v961 = vand.u32 2147483647, %v953
      %v962 = vand.u32 2147483647, %v954
      %v963 = vand.u32 2147483647, %v955
      %v964 = vand.u32 2147483647, %v956
      %v965 = vsub.f32 0.0, %v961
      %v966 = vsub.f32 0.0, %v962
      %v967 = vsub.f32 0.0, %v963
      %v968 = vsub.f32 0.0, %v964
      %v969 = vmul.f32 %v965, 1.442695
      %v970 = vpow.pop %v969
      %v971 = vmul.f32 %v966, 1.442695
      %v972 = vpow.pop %v971
      %v973 = vmul.f32 %v967, 1.442695
      %v974 = vpow.pop %v973
      %v975 = vmul.f32 %v968, 1.442695
      %v976 = vpow.pop %v975
      %v977 = vadd.f32 %v970, 1.0
      %v978 = vlog2.pop %v977
      %v979 = vmul.f32 %v978, 0.6931472
      %v980 = vmul.f32 -0.5, %v970
      %v981 = vadd.f32 %v980, 1.0
      %v982 = vmul.f32 %v981, %v970
      %v983 = vand.u32 2147483647, %v970
      %vm984 = vcmp.lt.f32.partialorder %v983, 0.0004427343
      %v985 = vsel %vm984, %v982, %v979
      %v986 = vadd.f32 %v972, 1.0
      %v987 = vlog2.pop %v986
      %v988 = vmul.f32 %v987, 0.6931472
      %v989 = vmul.f32 -0.5, %v972
      %v990 = vadd.f32 %v989, 1.0
      %v991 = vmul.f32 %v990, %v972
      %v992 = vand.u32 2147483647, %v972
      %vm993 = vcmp.lt.f32.partialorder %v992, 0.0004427343
      %v994 = vsel %vm993, %v991, %v988
      %v995 = vadd.f32 %v974, 1.0
      %v996 = vlog2.pop %v995
      %v997 = vmul.f32 %v996, 0.6931472
      %v998 = vmul.f32 -0.5, %v974
      %v999 = vadd.f32 %v998, 1.0
      %v1000 = vmul.f32 %v999, %v974
      %v1001 = vand.u32 2147483647, %v974
      %vm1002 = vcmp.lt.f32.partialorder %v1001, 0.0004427343
      %v1003 = vsel %vm1002, %v1000, %v997
      %v1004 = vadd.f32 %v976, 1.0
      %v1005 = vlog2.pop %v1004
      %v1006 = vmul.f32 %v1005, 0.6931472
      %v1007 = vmul.f32 -0.5, %v976
      %v1008 = vadd.f32 %v1007, 1.0
      %v1009 = vmul.f32 %v1008, %v976
      %v1010 = vand.u32 2147483647, %v976
      %vm1011 = vcmp.lt.f32.partialorder %v1010, 0.0004427343
      %v1012 = vsel %vm1011, %v1009, %v1006
      %v1013 = vsub.f32 %v957, %v985
      %v1014 = vsub.f32 %v958, %v994
      %v1015 = vsub.f32 %v959, %v1003
      %v1016 = vsub.f32 %v960, %v1012
      %v1017 = vadd.f32 %v844, %v1013
      %v1018 = vadd.f32 %v845, %v1014
      %v1019 = vadd.f32 %v846, %v1015
      %v1020 = vadd.f32 %v847, %v1016
      %1021 = vset.pattern.permute.xlu0 1
      %1022 = vperm.xlu0 %1021, %v394
      %v1023 = vpop.permute.xlu0 %1022
      %1024 = vset.pattern.permute.xlu0 1
      %1025 = vperm.xlu0 %1024, %v395
      %v1026 = vpop.permute.xlu0 %1025
      %1027 = vset.pattern.permute.xlu0 1
      %1028 = vperm.xlu0 %1027, %v396
      %v1029 = vpop.permute.xlu0 %1028
      %1030 = vset.pattern.permute.xlu0 1
      %1031 = vperm.xlu0 %1030, %v397
      %v1032 = vpop.permute.xlu0 %1031
      %vm1033 = vcmp.eq.s32.totalorder %v399, %v1023
      %vm1034 = vcmp.eq.s32.totalorder %v400, %v1023
      %vm1035 = vcmp.eq.s32.totalorder %v399, %v1026
      %vm1036 = vcmp.eq.s32.totalorder %v400, %v1026
      %vm1037 = vcmp.eq.s32.totalorder %v399, %v1029
      %vm1038 = vcmp.eq.s32.totalorder %v400, %v1029
      %vm1039 = vcmp.eq.s32.totalorder %v399, %v1032
      %vm1040 = vcmp.eq.s32.totalorder %v400, %v1032
      %v1041 = vsel %vm1033, 1, 0
      %v1042 = vsel %vm1034, 1, 0
      %v1043 = vsel %vm1035, 1, 0
      %v1044 = vsel %vm1036, 1, 0
      %v1045 = vsel %vm1037, 1, 0
      %v1046 = vsel %vm1038, 1, 0
      %v1047 = vsel %vm1039, 1, 0
      %v1048 = vsel %vm1040, 1, 0
      %v1049 = vcvt.s32.f32 %v1041
      %v1050 = vcvt.s32.f32 %v1042
      %v1051 = vcvt.s32.f32 %v1043
      %v1052 = vcvt.s32.f32 %v1044
      %v1053 = vcvt.s32.f32 %v1045
      %v1054 = vcvt.s32.f32 %v1046
      %v1055 = vcvt.s32.f32 %v1047
      %v1056 = vcvt.s32.f32 %v1048
      %v1057 = vpack.c.bf16 %v1051, %v1049
      %v1058 = vpack.c.bf16 %v1052, %v1050
      %v1059 = vpack.c.bf16 %v1055, %v1053
      %v1060 = vpack.c.bf16 %v1056, %v1054
      %1061 = vmatprep.subr.bf16.mxu0 0
      %1062 = vmatpush1.bf16.msra.mxu0 %v697
      %1063 = vmatprep.subr.bf16.mxu0 0
      %1064 = vmatpush1.bf16.msra.mxu0 %v696
      %1065 = vmatprep.subr.bf16.mxu0 0
      %1066 = vmatpush1.bf16.msra.mxu0 %v695
      %1067 = vmatprep.subr.bf16.mxu0 0
      %1068 = vmatpush1.bf16.msra.mxu0 %v694
      %1069 = vmatprep.subr.bf16.mxu0 0
      %1070 = vmatpush1.bf16.msra.mxu0 %v693
      %1071 = vmatprep.subr.bf16.mxu0 0
      %1072 = vmatpush1.bf16.msra.mxu0 %v692
      %1073 = vmatprep.subr.bf16.mxu0 0
      %1074 = vmatpush1.bf16.msra.mxu0 %v691
      %1075 = vmatprep.subr.bf16.mxu0 0
      %1076 = vmatpush1.bf16.msra.mxu0 %v690
      %1077 = vmatprep.subr.bf16.mxu0 0
      %1078 = vmatpush2.bf16.msra.mxu0 %v705
      %1079 = vmatprep.subr.bf16.mxu0 0
      %1080 = vmatpush2.bf16.msra.mxu0 %v704
      %1081 = vmatprep.subr.bf16.mxu0 0
      %1082 = vmatpush2.bf16.msra.mxu0 %v703
      %1083 = vmatprep.subr.bf16.mxu0 0
      %1084 = vmatpush2.bf16.msra.mxu0 %v702
      %1085 = vmatprep.subr.bf16.mxu0 0
      %1086 = vmatpush2.bf16.msra.mxu0 %v701
      %1087 = vmatprep.subr.bf16.mxu0 0
      %1088 = vmatpush2.bf16.msra.mxu0 %v700
      %1089 = vmatprep.subr.bf16.mxu0 0
      %1090 = vmatpush2.bf16.msra.mxu0 %v699
      %1091 = vmatprep.subr.bf16.mxu0 0
      %1092 = vmatpush2.bf16.msra.mxu0 %v698
      %1093 = vmatprep.mubr.bf16.mxu0 %v1058
      %1094 = vmatmul.mubr.bf16.gmra.mxu0 %v1057
      %v1095 = vpop.f32.mrf.mxu0
      %v1096 = vadd.f32 0.0, %v1095
      %v1097 = vpop.f32.mrf.mxu0
      %v1098 = vpop.f32.mrf.mxu0
      %v1099 = vadd.f32 0.0, %v1098
      %v1100 = vpop.f32.mrf.mxu0
      %1101 = vmatprep.mubr.bf16.mxu0 %v1060
      %1102 = vmatmul.mubr.bf16.gmra.mxu0 %v1059
      %v1103 = vpop.f32.mrf.mxu0
      %v1104 = vadd.f32 0.0, %v1103
      %v1105 = vpop.f32.mrf.mxu0
      %v1106 = vpop.f32.mrf.mxu0
      %v1107 = vadd.f32 0.0, %v1106
      %v1108 = vpop.f32.mrf.mxu0
      %1109 = vdwg.mxu0
      %v1110 = vmul.f32 %v1096, %v572
      %v1111 = vmul.f32 %v1099, %v575
      %v1112 = vmul.f32 %v1104, %v580
      %v1113 = vmul.f32 %v1107, %v583
      %v1114 = vsel %vm775, %v1110, 0.0
      %1115 = vadd.xlane.f32.xlu0 %v1114
      %v1116 = vpop.xlane.xlu0 %1115
      %v1117 = vsel %vm775, %v1111, 0.0
      %1118 = vadd.xlane.f32.xlu0 %v1117
      %v1119 = vpop.xlane.xlu0 %1118
      %v1120 = vsel %vm775, %v1112, 0.0
      %1121 = vadd.xlane.f32.xlu0 %v1120
      %v1122 = vpop.xlane.xlu0 %1121
      %v1123 = vsel %vm775, %v1113, 0.0
      %1124 = vadd.xlane.f32.xlu0 %v1123
      %v1125 = vpop.xlane.xlu0 %1124
      %v1126 = vsub.f32 0.0, %v1116
      %v1127 = vsub.f32 0.0, %v1119
      %v1128 = vsub.f32 0.0, %v1122
      %v1129 = vsub.f32 0.0, %v1125
      %v1130 = vmin.f32 %v1126, 0.0
      %v1131 = vmin.f32 %v1127, 0.0
      %v1132 = vmin.f32 %v1128, 0.0
      %v1133 = vmin.f32 %v1129, 0.0
      %v1134 = vand.u32 2147483647, %v1126
      %v1135 = vand.u32 2147483647, %v1127
      %v1136 = vand.u32 2147483647, %v1128
      %v1137 = vand.u32 2147483647, %v1129
      %v1138 = vsub.f32 0.0, %v1134
      %v1139 = vsub.f32 0.0, %v1135
      %v1140 = vsub.f32 0.0, %v1136
      %v1141 = vsub.f32 0.0, %v1137
      %v1142 = vmul.f32 %v1138, 1.442695
      %v1143 = vpow.pop %v1142
      %v1144 = vmul.f32 %v1139, 1.442695
      %v1145 = vpow.pop %v1144
      %v1146 = vmul.f32 %v1140, 1.442695
      %v1147 = vpow.pop %v1146
      %v1148 = vmul.f32 %v1141, 1.442695
      %v1149 = vpow.pop %v1148
      %v1150 = vadd.f32 %v1143, 1.0
      %v1151 = vlog2.pop %v1150
      %v1152 = vmul.f32 %v1151, 0.6931472
      %v1153 = vmul.f32 -0.5, %v1143
      %v1154 = vadd.f32 %v1153, 1.0
      %v1155 = vmul.f32 %v1154, %v1143
      %v1156 = vand.u32 2147483647, %v1143
      %vm1157 = vcmp.lt.f32.partialorder %v1156, 0.0004427343
      %v1158 = vsel %vm1157, %v1155, %v1152
      %v1159 = vadd.f32 %v1145, 1.0
      %v1160 = vlog2.pop %v1159
      %v1161 = vmul.f32 %v1160, 0.6931472
      %v1162 = vmul.f32 -0.5, %v1145
      %v1163 = vadd.f32 %v1162, 1.0
      %v1164 = vmul.f32 %v1163, %v1145
      %v1165 = vand.u32 2147483647, %v1145
      %vm1166 = vcmp.lt.f32.partialorder %v1165, 0.0004427343
      %v1167 = vsel %vm1166, %v1164, %v1161
      %v1168 = vadd.f32 %v1147, 1.0
      %v1169 = vlog2.pop %v1168
      %v1170 = vmul.f32 %v1169, 0.6931472
      %v1171 = vmul.f32 -0.5, %v1147
      %v1172 = vadd.f32 %v1171, 1.0
      %v1173 = vmul.f32 %v1172, %v1147
      %v1174 = vand.u32 2147483647, %v1147
      %vm1175 = vcmp.lt.f32.partialorder %v1174, 0.0004427343
      %v1176 = vsel %vm1175, %v1173, %v1170
      %v1177 = vadd.f32 %v1149, 1.0
      %v1178 = vlog2.pop %v1177
      %v1179 = vmul.f32 %v1178, 0.6931472
      %v1180 = vmul.f32 -0.5, %v1149
      %v1181 = vadd.f32 %v1180, 1.0
      %v1182 = vmul.f32 %v1181, %v1149
      %v1183 = vand.u32 2147483647, %v1149
      %vm1184 = vcmp.lt.f32.partialorder %v1183, 0.0004427343
      %v1185 = vsel %vm1184, %v1182, %v1179
      %v1186 = vsub.f32 %v1130, %v1158
      %v1187 = vsub.f32 %v1131, %v1167
      %v1188 = vsub.f32 %v1132, %v1176
      %v1189 = vsub.f32 %v1133, %v1185
      %v1190 = vadd.f32 %v1017, %v1186
      %v1191 = vadd.f32 %v1018, %v1187
      %v1192 = vadd.f32 %v1019, %v1188
      %v1193 = vadd.f32 %v1020, %v1189
      %1194 = vset.pattern.permute.xlu0 2
      %1195 = vperm.xlu0 %1194, %v394
      %v1196 = vpop.permute.xlu0 %1195
      %1197 = vset.pattern.permute.xlu0 2
      %1198 = vperm.xlu0 %1197, %v395
      %v1199 = vpop.permute.xlu0 %1198
      %1200 = vset.pattern.permute.xlu0 2
      %1201 = vperm.xlu0 %1200, %v396
      %v1202 = vpop.permute.xlu0 %1201
      %1203 = vset.pattern.permute.xlu0 2
      %1204 = vperm.xlu0 %1203, %v397
      %v1205 = vpop.permute.xlu0 %1204
      %vm1206 = vcmp.eq.s32.totalorder %v399, %v1196
      %vm1207 = vcmp.eq.s32.totalorder %v400, %v1196
      %vm1208 = vcmp.eq.s32.totalorder %v399, %v1199
      %vm1209 = vcmp.eq.s32.totalorder %v400, %v1199
      %vm1210 = vcmp.eq.s32.totalorder %v399, %v1202
      %vm1211 = vcmp.eq.s32.totalorder %v400, %v1202
      %vm1212 = vcmp.eq.s32.totalorder %v399, %v1205
      %vm1213 = vcmp.eq.s32.totalorder %v400, %v1205
      %v1214 = vsel %vm1206, 1, 0
      %v1215 = vsel %vm1207, 1, 0
      %v1216 = vsel %vm1208, 1, 0
      %v1217 = vsel %vm1209, 1, 0
      %v1218 = vsel %vm1210, 1, 0
      %v1219 = vsel %vm1211, 1, 0
      %v1220 = vsel %vm1212, 1, 0
      %v1221 = vsel %vm1213, 1, 0
      %v1222 = vcvt.s32.f32 %v1214
      %v1223 = vcvt.s32.f32 %v1215
      %v1224 = vcvt.s32.f32 %v1216
      %v1225 = vcvt.s32.f32 %v1217
      %v1226 = vcvt.s32.f32 %v1218
      %v1227 = vcvt.s32.f32 %v1219
      %v1228 = vcvt.s32.f32 %v1220
      %v1229 = vcvt.s32.f32 %v1221
      %v1230 = vpack.c.bf16 %v1224, %v1222
      %v1231 = vpack.c.bf16 %v1225, %v1223
      %v1232 = vpack.c.bf16 %v1228, %v1226
      %v1233 = vpack.c.bf16 %v1229, %v1227
      %1234 = vmatprep.subr.bf16.mxu0 0
      %1235 = vmatpush1.bf16.msra.mxu0 %v697
      %1236 = vmatprep.subr.bf16.mxu0 0
      %1237 = vmatpush1.bf16.msra.mxu0 %v696
      %1238 = vmatprep.subr.bf16.mxu0 0
      %1239 = vmatpush1.bf16.msra.mxu0 %v695
      %1240 = vmatprep.subr.bf16.mxu0 0
      %1241 = vmatpush1.bf16.msra.mxu0 %v694
      %1242 = vmatprep.subr.bf16.mxu0 0
      %1243 = vmatpush1.bf16.msra.mxu0 %v693
      %1244 = vmatprep.subr.bf16.mxu0 0
      %1245 = vmatpush1.bf16.msra.mxu0 %v692
      %1246 = vmatprep.subr.bf16.mxu0 0
      %1247 = vmatpush1.bf16.msra.mxu0 %v691
      %1248 = vmatprep.subr.bf16.mxu0 0
      %1249 = vmatpush1.bf16.msra.mxu0 %v690
      %1250 = vmatprep.subr.bf16.mxu0 0
      %1251 = vmatpush2.bf16.msra.mxu0 %v705
      %1252 = vmatprep.subr.bf16.mxu0 0
      %1253 = vmatpush2.bf16.msra.mxu0 %v704
      %1254 = vmatprep.subr.bf16.mxu0 0
      %1255 = vmatpush2.bf16.msra.mxu0 %v703
      %1256 = vmatprep.subr.bf16.mxu0 0
      %1257 = vmatpush2.bf16.msra.mxu0 %v702
      %1258 = vmatprep.subr.bf16.mxu0 0
      %1259 = vmatpush2.bf16.msra.mxu0 %v701
      %1260 = vmatprep.subr.bf16.mxu0 0
      %1261 = vmatpush2.bf16.msra.mxu0 %v700
      %1262 = vmatprep.subr.bf16.mxu0 0
      %1263 = vmatpush2.bf16.msra.mxu0 %v699
      %1264 = vmatprep.subr.bf16.mxu0 0
      %1265 = vmatpush2.bf16.msra.mxu0 %v698
      %1266 = vmatprep.mubr.bf16.mxu0 %v1231
      %1267 = vmatmul.mubr.bf16.gmra.mxu0 %v1230
      %v1268 = vpop.f32.mrf.mxu0
      %v1269 = vadd.f32 0.0, %v1268
      %v1270 = vpop.f32.mrf.mxu0
      %v1271 = vpop.f32.mrf.mxu0
      %v1272 = vadd.f32 0.0, %v1271
      %v1273 = vpop.f32.mrf.mxu0
      %1274 = vmatprep.mubr.bf16.mxu0 %v1233
      %1275 = vmatmul.mubr.bf16.gmra.mxu0 %v1232
      %v1276 = vpop.f32.mrf.mxu0
      %v1277 = vadd.f32 0.0, %v1276
      %v1278 = vpop.f32.mrf.mxu0
      %v1279 = vpop.f32.mrf.mxu0
      %v1280 = vadd.f32 0.0, %v1279
      %v1281 = vpop.f32.mrf.mxu0
      %1282 = vdwg.mxu0
      %v1283 = vmul.f32 %v1269, %v572
      %v1284 = vmul.f32 %v1272, %v575
      %v1285 = vmul.f32 %v1277, %v580
      %v1286 = vmul.f32 %v1280, %v583
      %v1287 = vsel %vm775, %v1283, 0.0
      %1288 = vadd.xlane.f32.xlu0 %v1287
      %v1289 = vpop.xlane.xlu0 %1288
      %v1290 = vsel %vm775, %v1284, 0.0
      %1291 = vadd.xlane.f32.xlu0 %v1290
      %v1292 = vpop.xlane.xlu0 %1291
      %v1293 = vsel %vm775, %v1285, 0.0
      %1294 = vadd.xlane.f32.xlu0 %v1293
      %v1295 = vpop.xlane.xlu0 %1294
      %v1296 = vsel %vm775, %v1286, 0.0
      %1297 = vadd.xlane.f32.xlu0 %v1296
      %v1298 = vpop.xlane.xlu0 %1297
      %v1299 = vsub.f32 0.0, %v1289
      %v1300 = vsub.f32 0.0, %v1292
      %v1301 = vsub.f32 0.0, %v1295
      %v1302 = vsub.f32 0.0, %v1298
      %v1303 = vmin.f32 %v1299, 0.0
      %v1304 = vmin.f32 %v1300, 0.0
      %v1305 = vmin.f32 %v1301, 0.0
      %v1306 = vmin.f32 %v1302, 0.0
      %v1307 = vand.u32 2147483647, %v1299
      %v1308 = vand.u32 2147483647, %v1300
      %v1309 = vand.u32 2147483647, %v1301
      %v1310 = vand.u32 2147483647, %v1302
      %v1311 = vsub.f32 0.0, %v1307
      %v1312 = vsub.f32 0.0, %v1308
      %v1313 = vsub.f32 0.0, %v1309
      %v1314 = vsub.f32 0.0, %v1310
      %v1315 = vmul.f32 %v1311, 1.442695
      %v1316 = vpow.pop %v1315
      %v1317 = vmul.f32 %v1312, 1.442695
      %v1318 = vpow.pop %v1317
      %v1319 = vmul.f32 %v1313, 1.442695
      %v1320 = vpow.pop %v1319
      %v1321 = vmul.f32 %v1314, 1.442695
      %v1322 = vpow.pop %v1321
      %v1323 = vadd.f32 %v1316, 1.0
      %v1324 = vlog2.pop %v1323
      %v1325 = vmul.f32 %v1324, 0.6931472
      %v1326 = vmul.f32 -0.5, %v1316
      %v1327 = vadd.f32 %v1326, 1.0
      %v1328 = vmul.f32 %v1327, %v1316
      %v1329 = vand.u32 2147483647, %v1316
      %vm1330 = vcmp.lt.f32.partialorder %v1329, 0.0004427343
      %v1331 = vsel %vm1330, %v1328, %v1325
      %v1332 = vadd.f32 %v1318, 1.0
      %v1333 = vlog2.pop %v1332
      %v1334 = vmul.f32 %v1333, 0.6931472
      %v1335 = vmul.f32 -0.5, %v1318
      %v1336 = vadd.f32 %v1335, 1.0
      %v1337 = vmul.f32 %v1336, %v1318
      %v1338 = vand.u32 2147483647, %v1318
      %vm1339 = vcmp.lt.f32.partialorder %v1338, 0.0004427343
      %v1340 = vsel %vm1339, %v1337, %v1334
      %v1341 = vadd.f32 %v1320, 1.0
      %v1342 = vlog2.pop %v1341
      %v1343 = vmul.f32 %v1342, 0.6931472
      %v1344 = vmul.f32 -0.5, %v1320
      %v1345 = vadd.f32 %v1344, 1.0
      %v1346 = vmul.f32 %v1345, %v1320
      %v1347 = vand.u32 2147483647, %v1320
      %vm1348 = vcmp.lt.f32.partialorder %v1347, 0.0004427343
      %v1349 = vsel %vm1348, %v1346, %v1343
      %v1350 = vadd.f32 %v1322, 1.0
      %v1351 = vlog2.pop %v1350
      %v1352 = vmul.f32 %v1351, 0.6931472
      %v1353 = vmul.f32 -0.5, %v1322
      %v1354 = vadd.f32 %v1353, 1.0
      %v1355 = vmul.f32 %v1354, %v1322
      %v1356 = vand.u32 2147483647, %v1322
      %vm1357 = vcmp.lt.f32.partialorder %v1356, 0.0004427343
      %v1358 = vsel %vm1357, %v1355, %v1352
      %v1359 = vsub.f32 %v1303, %v1331
      %v1360 = vsub.f32 %v1304, %v1340
      %v1361 = vsub.f32 %v1305, %v1349
      %v1362 = vsub.f32 %v1306, %v1358
      %v1363 = vadd.f32 %v1190, %v1359
      %v1364 = vadd.f32 %v1191, %v1360
      %v1365 = vadd.f32 %v1192, %v1361
      %v1366 = vadd.f32 %v1193, %v1362
      %1367 = vset.pattern.permute.xlu0 3
      %1368 = vperm.xlu0 %1367, %v394
      %v1369 = vpop.permute.xlu0 %1368
      %1370 = vset.pattern.permute.xlu0 3
      %1371 = vperm.xlu0 %1370, %v395
      %v1372 = vpop.permute.xlu0 %1371
      %1373 = vset.pattern.permute.xlu0 3
      %1374 = vperm.xlu0 %1373, %v396
      %v1375 = vpop.permute.xlu0 %1374
      %1376 = vset.pattern.permute.xlu0 3
      %1377 = vperm.xlu0 %1376, %v397
      %v1378 = vpop.permute.xlu0 %1377
      %vm1379 = vcmp.eq.s32.totalorder %v399, %v1369
      %vm1380 = vcmp.eq.s32.totalorder %v400, %v1369
      %vm1381 = vcmp.eq.s32.totalorder %v399, %v1372
      %vm1382 = vcmp.eq.s32.totalorder %v400, %v1372
      %vm1383 = vcmp.eq.s32.totalorder %v399, %v1375
      %vm1384 = vcmp.eq.s32.totalorder %v400, %v1375
      %vm1385 = vcmp.eq.s32.totalorder %v399, %v1378
      %vm1386 = vcmp.eq.s32.totalorder %v400, %v1378
      %v1387 = vsel %vm1379, 1, 0
      %v1388 = vsel %vm1380, 1, 0
      %v1389 = vsel %vm1381, 1, 0
      %v1390 = vsel %vm1382, 1, 0
      %v1391 = vsel %vm1383, 1, 0
      %v1392 = vsel %vm1384, 1, 0
      %v1393 = vsel %vm1385, 1, 0
      %v1394 = vsel %vm1386, 1, 0
      %v1395 = vcvt.s32.f32 %v1387
      %v1396 = vcvt.s32.f32 %v1388
      %v1397 = vcvt.s32.f32 %v1389
      %v1398 = vcvt.s32.f32 %v1390
      %v1399 = vcvt.s32.f32 %v1391
      %v1400 = vcvt.s32.f32 %v1392
      %v1401 = vcvt.s32.f32 %v1393
      %v1402 = vcvt.s32.f32 %v1394
      %v1403 = vpack.c.bf16 %v1397, %v1395
      %v1404 = vpack.c.bf16 %v1398, %v1396
      %v1405 = vpack.c.bf16 %v1401, %v1399
      %v1406 = vpack.c.bf16 %v1402, %v1400
      %1407 = vmatprep.subr.bf16.mxu0 0
      %1408 = vmatpush1.bf16.msra.mxu0 %v697
      %1409 = vmatprep.subr.bf16.mxu0 0
      %1410 = vmatpush1.bf16.msra.mxu0 %v696
      %1411 = vmatprep.subr.bf16.mxu0 0
      %1412 = vmatpush1.bf16.msra.mxu0 %v695
      %1413 = vmatprep.subr.bf16.mxu0 0
      %1414 = vmatpush1.bf16.msra.mxu0 %v694
      %1415 = vmatprep.subr.bf16.mxu0 0
      %1416 = vmatpush1.bf16.msra.mxu0 %v693
      %1417 = vmatprep.subr.bf16.mxu0 0
      %1418 = vmatpush1.bf16.msra.mxu0 %v692
      %1419 = vmatprep.subr.bf16.mxu0 0
      %1420 = vmatpush1.bf16.msra.mxu0 %v691
      %1421 = vmatprep.subr.bf16.mxu0 0
      %1422 = vmatpush1.bf16.msra.mxu0 %v690
      %1423 = vmatprep.subr.bf16.mxu0 0
      %1424 = vmatpush2.bf16.msra.mxu0 %v705
      %1425 = vmatprep.subr.bf16.mxu0 0
      %1426 = vmatpush2.bf16.msra.mxu0 %v704
      %1427 = vmatprep.subr.bf16.mxu0 0
      %1428 = vmatpush2.bf16.msra.mxu0 %v703
      %1429 = vmatprep.subr.bf16.mxu0 0
      %1430 = vmatpush2.bf16.msra.mxu0 %v702
      %1431 = vmatprep.subr.bf16.mxu0 0
      %1432 = vmatpush2.bf16.msra.mxu0 %v701
      %1433 = vmatprep.subr.bf16.mxu0 0
      %1434 = vmatpush2.bf16.msra.mxu0 %v700
      %1435 = vmatprep.subr.bf16.mxu0 0
      %1436 = vmatpush2.bf16.msra.mxu0 %v699
      %1437 = vmatprep.subr.bf16.mxu0 0
      %1438 = vmatpush2.bf16.msra.mxu0 %v698
      %1439 = vmatprep.mubr.bf16.mxu0 %v1404
      %1440 = vmatmul.mubr.bf16.gmra.mxu0 %v1403
      %v1441 = vpop.f32.mrf.mxu0
      %v1442 = vadd.f32 0.0, %v1441
      %v1443 = vpop.f32.mrf.mxu0
      %v1444 = vpop.f32.mrf.mxu0
      %v1445 = vadd.f32 0.0, %v1444
      %v1446 = vpop.f32.mrf.mxu0
      %1447 = vmatprep.mubr.bf16.mxu0 %v1406
      %1448 = vmatmul.mubr.bf16.gmra.mxu0 %v1405
      %v1449 = vpop.f32.mrf.mxu0
      %v1450 = vadd.f32 0.0, %v1449
      %v1451 = vpop.f32.mrf.mxu0
      %v1452 = vpop.f32.mrf.mxu0
      %v1453 = vadd.f32 0.0, %v1452
      %v1454 = vpop.f32.mrf.mxu0
      %1455 = vdwg.mxu0
      %v1456 = vmul.f32 %v1442, %v572
      %v1457 = vmul.f32 %v1445, %v575
      %v1458 = vmul.f32 %v1450, %v580
      %v1459 = vmul.f32 %v1453, %v583
      %v1460 = vsel %vm775, %v1456, 0.0
      %1461 = vadd.xlane.f32.xlu0 %v1460
      %v1462 = vpop.xlane.xlu0 %1461
      %v1463 = vsel %vm775, %v1457, 0.0
      %1464 = vadd.xlane.f32.xlu0 %v1463
      %v1465 = vpop.xlane.xlu0 %1464
      %v1466 = vsel %vm775, %v1458, 0.0
      %1467 = vadd.xlane.f32.xlu0 %v1466
      %v1468 = vpop.xlane.xlu0 %1467
      %v1469 = vsel %vm775, %v1459, 0.0
      %1470 = vadd.xlane.f32.xlu0 %v1469
      %v1471 = vpop.xlane.xlu0 %1470
      %v1472 = vsub.f32 0.0, %v1462
      %v1473 = vsub.f32 0.0, %v1465
      %v1474 = vsub.f32 0.0, %v1468
      %v1475 = vsub.f32 0.0, %v1471
      %v1476 = vmin.f32 %v1472, 0.0
      %v1477 = vmin.f32 %v1473, 0.0
      %v1478 = vmin.f32 %v1474, 0.0
      %v1479 = vmin.f32 %v1475, 0.0
      %v1480 = vand.u32 2147483647, %v1472
      %v1481 = vand.u32 2147483647, %v1473
      %v1482 = vand.u32 2147483647, %v1474
      %v1483 = vand.u32 2147483647, %v1475
      %v1484 = vsub.f32 0.0, %v1480
      %v1485 = vsub.f32 0.0, %v1481
      %v1486 = vsub.f32 0.0, %v1482
      %v1487 = vsub.f32 0.0, %v1483
      %v1488 = vmul.f32 %v1484, 1.442695
      %v1489 = vpow.pop %v1488
      %v1490 = vmul.f32 %v1485, 1.442695
      %v1491 = vpow.pop %v1490
      %v1492 = vmul.f32 %v1486, 1.442695
      %v1493 = vpow.pop %v1492
      %v1494 = vmul.f32 %v1487, 1.442695
      %v1495 = vpow.pop %v1494
      %v1496 = vadd.f32 %v1489, 1.0
      %v1497 = vlog2.pop %v1496
      %v1498 = vmul.f32 %v1497, 0.6931472
      %v1499 = vmul.f32 -0.5, %v1489
      %v1500 = vadd.f32 %v1499, 1.0
      %v1501 = vmul.f32 %v1500, %v1489
      %v1502 = vand.u32 2147483647, %v1489
      %vm1503 = vcmp.lt.f32.partialorder %v1502, 0.0004427343
      %v1504 = vsel %vm1503, %v1501, %v1498
      %v1505 = vadd.f32 %v1491, 1.0
      %v1506 = vlog2.pop %v1505
      %v1507 = vmul.f32 %v1506, 0.6931472
      %v1508 = vmul.f32 -0.5, %v1491
      %v1509 = vadd.f32 %v1508, 1.0
      %v1510 = vmul.f32 %v1509, %v1491
      %v1511 = vand.u32 2147483647, %v1491
      %vm1512 = vcmp.lt.f32.partialorder %v1511, 0.0004427343
      %v1513 = vsel %vm1512, %v1510, %v1507
      %v1514 = vadd.f32 %v1493, 1.0
      %v1515 = vlog2.pop %v1514
      %v1516 = vmul.f32 %v1515, 0.6931472
      %v1517 = vmul.f32 -0.5, %v1493
      %v1518 = vadd.f32 %v1517, 1.0
      %v1519 = vmul.f32 %v1518, %v1493
      %v1520 = vand.u32 2147483647, %v1493
      %vm1521 = vcmp.lt.f32.partialorder %v1520, 0.0004427343
      %v1522 = vsel %vm1521, %v1519, %v1516
      %v1523 = vadd.f32 %v1495, 1.0
      %v1524 = vlog2.pop %v1523
      %v1525 = vmul.f32 %v1524, 0.6931472
      %v1526 = vmul.f32 -0.5, %v1495
      %v1527 = vadd.f32 %v1526, 1.0
      %v1528 = vmul.f32 %v1527, %v1495
      %v1529 = vand.u32 2147483647, %v1495
      %vm1530 = vcmp.lt.f32.partialorder %v1529, 0.0004427343
      %v1531 = vsel %vm1530, %v1528, %v1525
      %v1532 = vsub.f32 %v1476, %v1504
      %v1533 = vsub.f32 %v1477, %v1513
      %v1534 = vsub.f32 %v1478, %v1522
      %v1535 = vsub.f32 %v1479, %v1531
      %v1536 = vadd.f32 %v1363, %v1532
      %v1537 = vadd.f32 %v1364, %v1533
      %v1538 = vadd.f32 %v1365, %v1534
      %v1539 = vadd.f32 %v1366, %v1535
      %1540 = vset.pattern.permute.xlu0 4
      %1541 = vperm.xlu0 %1540, %v394
      %v1542 = vpop.permute.xlu0 %1541
      %1543 = vset.pattern.permute.xlu0 4
      %1544 = vperm.xlu0 %1543, %v395
      %v1545 = vpop.permute.xlu0 %1544
      %1546 = vset.pattern.permute.xlu0 4
      %1547 = vperm.xlu0 %1546, %v396
      %v1548 = vpop.permute.xlu0 %1547
      %1549 = vset.pattern.permute.xlu0 4
      %1550 = vperm.xlu0 %1549, %v397
      %v1551 = vpop.permute.xlu0 %1550
      %vm1552 = vcmp.eq.s32.totalorder %v399, %v1542
      %vm1553 = vcmp.eq.s32.totalorder %v400, %v1542
      %vm1554 = vcmp.eq.s32.totalorder %v399, %v1545
      %vm1555 = vcmp.eq.s32.totalorder %v400, %v1545
      %vm1556 = vcmp.eq.s32.totalorder %v399, %v1548
      %vm1557 = vcmp.eq.s32.totalorder %v400, %v1548
      %vm1558 = vcmp.eq.s32.totalorder %v399, %v1551
      %vm1559 = vcmp.eq.s32.totalorder %v400, %v1551
      %v1560 = vsel %vm1552, 1, 0
      %v1561 = vsel %vm1553, 1, 0
      %v1562 = vsel %vm1554, 1, 0
      %v1563 = vsel %vm1555, 1, 0
      %v1564 = vsel %vm1556, 1, 0
      %v1565 = vsel %vm1557, 1, 0
      %v1566 = vsel %vm1558, 1, 0
      %v1567 = vsel %vm1559, 1, 0
      %v1568 = vcvt.s32.f32 %v1560
      %v1569 = vcvt.s32.f32 %v1561
      %v1570 = vcvt.s32.f32 %v1562
      %v1571 = vcvt.s32.f32 %v1563
      %v1572 = vcvt.s32.f32 %v1564
      %v1573 = vcvt.s32.f32 %v1565
      %v1574 = vcvt.s32.f32 %v1566
      %v1575 = vcvt.s32.f32 %v1567
      %v1576 = vpack.c.bf16 %v1570, %v1568
      %v1577 = vpack.c.bf16 %v1571, %v1569
      %v1578 = vpack.c.bf16 %v1574, %v1572
      %v1579 = vpack.c.bf16 %v1575, %v1573
      %1580 = vmatprep.subr.bf16.mxu0 0
      %1581 = vmatpush1.bf16.msra.mxu0 %v697
      %1582 = vmatprep.subr.bf16.mxu0 0
      %1583 = vmatpush1.bf16.msra.mxu0 %v696
      %1584 = vmatprep.subr.bf16.mxu0 0
      %1585 = vmatpush1.bf16.msra.mxu0 %v695
      %1586 = vmatprep.subr.bf16.mxu0 0
      %1587 = vmatpush1.bf16.msra.mxu0 %v694
      %1588 = vmatprep.subr.bf16.mxu0 0
      %1589 = vmatpush1.bf16.msra.mxu0 %v693
      %1590 = vmatprep.subr.bf16.mxu0 0
      %1591 = vmatpush1.bf16.msra.mxu0 %v692
      %1592 = vmatprep.subr.bf16.mxu0 0
      %1593 = vmatpush1.bf16.msra.mxu0 %v691
      %1594 = vmatprep.subr.bf16.mxu0 0
      %1595 = vmatpush1.bf16.msra.mxu0 %v690
      %1596 = vmatprep.subr.bf16.mxu0 0
      %1597 = vmatpush2.bf16.msra.mxu0 %v705
      %1598 = vmatprep.subr.bf16.mxu0 0
      %1599 = vmatpush2.bf16.msra.mxu0 %v704
      %1600 = vmatprep.subr.bf16.mxu0 0
      %1601 = vmatpush2.bf16.msra.mxu0 %v703
      %1602 = vmatprep.subr.bf16.mxu0 0
      %1603 = vmatpush2.bf16.msra.mxu0 %v702
      %1604 = vmatprep.subr.bf16.mxu0 0
      %1605 = vmatpush2.bf16.msra.mxu0 %v701
      %1606 = vmatprep.subr.bf16.mxu0 0
      %1607 = vmatpush2.bf16.msra.mxu0 %v700
      %1608 = vmatprep.subr.bf16.mxu0 0
      %1609 = vmatpush2.bf16.msra.mxu0 %v699
      %1610 = vmatprep.subr.bf16.mxu0 0
      %1611 = vmatpush2.bf16.msra.mxu0 %v698
      %1612 = vmatprep.mubr.bf16.mxu0 %v1577
      %1613 = vmatmul.mubr.bf16.gmra.mxu0 %v1576
      %v1614 = vpop.f32.mrf.mxu0
      %v1615 = vadd.f32 0.0, %v1614
      %v1616 = vpop.f32.mrf.mxu0
      %v1617 = vpop.f32.mrf.mxu0
      %v1618 = vadd.f32 0.0, %v1617
      %v1619 = vpop.f32.mrf.mxu0
      %1620 = vmatprep.mubr.bf16.mxu0 %v1579
      %1621 = vmatmul.mubr.bf16.gmra.mxu0 %v1578
      %v1622 = vpop.f32.mrf.mxu0
      %v1623 = vadd.f32 0.0, %v1622
      %v1624 = vpop.f32.mrf.mxu0
      %v1625 = vpop.f32.mrf.mxu0
      %v1626 = vadd.f32 0.0, %v1625
      %v1627 = vpop.f32.mrf.mxu0
      %1628 = vdwg.mxu0
      %v1629 = vmul.f32 %v1615, %v572
      %v1630 = vmul.f32 %v1618, %v575
      %v1631 = vmul.f32 %v1623, %v580
      %v1632 = vmul.f32 %v1626, %v583
      %v1633 = vsel %vm775, %v1629, 0.0
      %1634 = vadd.xlane.f32.xlu0 %v1633
      %v1635 = vpop.xlane.xlu0 %1634
      %v1636 = vsel %vm775, %v1630, 0.0
      %1637 = vadd.xlane.f32.xlu0 %v1636
      %v1638 = vpop.xlane.xlu0 %1637
      %v1639 = vsel %vm775, %v1631, 0.0
      %1640 = vadd.xlane.f32.xlu0 %v1639
      %v1641 = vpop.xlane.xlu0 %1640
      %v1642 = vsel %vm775, %v1632, 0.0
      %1643 = vadd.xlane.f32.xlu0 %v1642
      %v1644 = vpop.xlane.xlu0 %1643
      %v1645 = vsub.f32 0.0, %v1635
      %v1646 = vsub.f32 0.0, %v1638
      %v1647 = vsub.f32 0.0, %v1641
      %v1648 = vsub.f32 0.0, %v1644
      %v1649 = vmin.f32 %v1645, 0.0
      %v1650 = vmin.f32 %v1646, 0.0
      %v1651 = vmin.f32 %v1647, 0.0
      %v1652 = vmin.f32 %v1648, 0.0
      %v1653 = vand.u32 2147483647, %v1645
      %v1654 = vand.u32 2147483647, %v1646
      %v1655 = vand.u32 2147483647, %v1647
      %v1656 = vand.u32 2147483647, %v1648
      %v1657 = vsub.f32 0.0, %v1653
      %v1658 = vsub.f32 0.0, %v1654
      %v1659 = vsub.f32 0.0, %v1655
      %v1660 = vsub.f32 0.0, %v1656
      %v1661 = vmul.f32 %v1657, 1.442695
      %v1662 = vpow.pop %v1661
      %v1663 = vmul.f32 %v1658, 1.442695
      %v1664 = vpow.pop %v1663
      %v1665 = vmul.f32 %v1659, 1.442695
      %v1666 = vpow.pop %v1665
      %v1667 = vmul.f32 %v1660, 1.442695
      %v1668 = vpow.pop %v1667
      %v1669 = vadd.f32 %v1662, 1.0
      %v1670 = vlog2.pop %v1669
      %v1671 = vmul.f32 %v1670, 0.6931472
      %v1672 = vmul.f32 -0.5, %v1662
      %v1673 = vadd.f32 %v1672, 1.0
      %v1674 = vmul.f32 %v1673, %v1662
      %v1675 = vand.u32 2147483647, %v1662
      %vm1676 = vcmp.lt.f32.partialorder %v1675, 0.0004427343
      %v1677 = vsel %vm1676, %v1674, %v1671
      %v1678 = vadd.f32 %v1664, 1.0
      %v1679 = vlog2.pop %v1678
      %v1680 = vmul.f32 %v1679, 0.6931472
      %v1681 = vmul.f32 -0.5, %v1664
      %v1682 = vadd.f32 %v1681, 1.0
      %v1683 = vmul.f32 %v1682, %v1664
      %v1684 = vand.u32 2147483647, %v1664
      %vm1685 = vcmp.lt.f32.partialorder %v1684, 0.0004427343
      %v1686 = vsel %vm1685, %v1683, %v1680
      %v1687 = vadd.f32 %v1666, 1.0
      %v1688 = vlog2.pop %v1687
      %v1689 = vmul.f32 %v1688, 0.6931472
      %v1690 = vmul.f32 -0.5, %v1666
      %v1691 = vadd.f32 %v1690, 1.0
      %v1692 = vmul.f32 %v1691, %v1666
      %v1693 = vand.u32 2147483647, %v1666
      %vm1694 = vcmp.lt.f32.partialorder %v1693, 0.0004427343
      %v1695 = vsel %vm1694, %v1692, %v1689
      %v1696 = vadd.f32 %v1668, 1.0
      %v1697 = vlog2.pop %v1696
      %v1698 = vmul.f32 %v1697, 0.6931472
      %v1699 = vmul.f32 -0.5, %v1668
      %v1700 = vadd.f32 %v1699, 1.0
      %v1701 = vmul.f32 %v1700, %v1668
      %v1702 = vand.u32 2147483647, %v1668
      %vm1703 = vcmp.lt.f32.partialorder %v1702, 0.0004427343
      %v1704 = vsel %vm1703, %v1701, %v1698
      %v1705 = vsub.f32 %v1649, %v1677
      %v1706 = vsub.f32 %v1650, %v1686
      %v1707 = vsub.f32 %v1651, %v1695
      %v1708 = vsub.f32 %v1652, %v1704
      %v1709 = vadd.f32 %v1536, %v1705
      %v1710 = vadd.f32 %v1537, %v1706
      %v1711 = vadd.f32 %v1538, %v1707
      %v1712 = vadd.f32 %v1539, %v1708
      %s1713 = smul.u32 %s20, 4
      %s1714 = sadd.s32 %s1713, %s21
      %v1715 = vlaneseq
      %v1716 = vshrl.u32 %v1715, 7
      %v1717 = vadd.s32 %v1716, 8
      %v1718 = vadd.s32 %v1716, 16
      %v1719 = vadd.s32 %v1716, 24
      %s1720 = smul.u32 %s1714, 32
      %v1721 = vstv %s1720
      %v1722 = vadd.s32 %v1716, %v1721
      %v1723 = vadd.s32 %v1717, %v1721
      %v1724 = vadd.s32 %v1718, %v1721
      %v1725 = vadd.s32 %v1719, %v1721
      %vm1726 = vcmp.lt.s32.totalorder %v1722, 200
      %vm1727 = vcmp.lt.s32.totalorder %v1723, 200
      %vm1728 = vcmp.lt.s32.totalorder %v1724, 200
      %vm1729 = vcmp.lt.s32.totalorder %v1725, 200
      %v1730 = vsel %vm1726, 1, 0
      %v1731 = vsel %vm1727, 1, 0
      %v1732 = vsel %vm1728, 1, 0
      %v1733 = vsel %vm1729, 1, 0
      %v1734 = vcvt.s32.f32 %v1730
      %v1735 = vcvt.s32.f32 %v1731
      %v1736 = vcvt.s32.f32 %v1732
      %v1737 = vcvt.s32.f32 %v1733
      %v1738 = vmul.f32 %v1709, %v1734
      %v1739 = vmul.f32 %v1710, %v1735
      %v1740 = vmul.f32 %v1711, %v1736
      %v1741 = vmul.f32 %v1712, %v1737
      %vm1742 = vcmask 7168
      %v1743 = vsel %vm1742, %v1738, 0.0
      %v1744 = vsel %vm1742, %v1739, 0.0
      %v1745 = vadd.f32 %v1743, %v1744
      %v1746 = vsel %vm1742, %v1740, 0.0
      %v1747 = vadd.f32 %v1745, %v1746
      %v1748 = vsel %vm1742, %v1741, 0.0
      %v1749 = vadd.f32 %v1747, %v1748
      %1750 = vadd.xlane.f32.xlu0 %v1749
      %v1751 = vpop.xlane.xlu0 %1750
      %v1752 = vrot.slane %v1751, 4
      %v1753 = vadd.f32 %v1751, %v1752
      %v1754 = vrot.slane %v1753, 2
      %v1755 = vadd.f32 %v1753, %v1754
      %v1756 = vrot.slane %v1755, 1
      %v1757 = vadd.f32 %v1755, %v1756
      %s1758 = vtos %v1757
      %v1759 = vld [vmem:[#allocation2] sm:$0x1]
      %s1760 = ssub.f32 0.0, %s1758
      %v1761 = vstv %s1760
      %v1762 = vadd.f32 %v1759, %v1761
      %vm1763 = vcmask 0
      %1764 = vst.msk [vmem:[#allocation2] sm:$0x1] %vm1763, %v1762
      %p1765 = scmp.eq.s32.totalorder %s21, 3
      // Predicated region
      $region45: #{tpu_custom_call.1} parent=39 // pred_check
        %p1766 = pneg %p1765
      $region46: #{tpu_custom_call.1} parent=39 // pred_check_branch
        %1768 = sbr.rel (%p1766) target = $region48
      $region47: #{tpu_custom_call.1} parent=39 // pred_region
        %v1769 = vld [vmem:[#allocation2] sm:$0x1]
        %1770 = vst.msk [vmem:[%s314] sm:$0x1] %vm1763, %v1769
      $region48: #{tpu_custom_call.1} parent=39 // pred_fallthru
        _
      %p1771 = scmp.lt.s32.totalorder %s20, 1
      %s1772 = scalar_select %p1771, %s20, 1
      %s1773 = scalar_lea.vmem %s5, %s1772
      // Predicated region
      $region49: #{tpu_custom_call.1} parent=39 // pred_check
        %p1774 = pneg %p178
      $region50: #{tpu_custom_call.1} parent=39 // pred_check_branch
        %1776 = sbr.rel (%p1774) target = $region52
      $region51: #{tpu_custom_call.1} parent=39 // pred_region
        _
      $region52: #{tpu_custom_call.1} parent=39 // pred_fallthru
        _
    $region40: #{tpu_custom_call.1} parent=5 // pred_fallthru
      _
    %p1777 = scmp.le.s32.totalorder 2, %s11
    // Predicated region
    $region53: #{tpu_custom_call.1} parent=5 // pred_check
      %p1778 = pneg %p1777
    $region54: #{tpu_custom_call.1} parent=5 // pred_check_branch
      %1780 = sbr.rel (%p1778) target = $region56
    $region55: #{tpu_custom_call.1} parent=5 // pred_region
      %s1781 = ssub.s32 %s11, 2
      // Predicated region
      $region57: #{tpu_custom_call.1} parent=55 // pred_check
        %p1782 = pneg %p184
      $region58: #{tpu_custom_call.1} parent=55 // pred_check_branch
        %1784 = sbr.rel (%p1782) target = $region60
      $region59: #{tpu_custom_call.1} parent=55 // pred_region
        %p1785 = scmp.lt.s32.totalorder %s22, 1
        %s1786 = scalar_select %p1785, %s22, 1
        %s1787 = scalar_lea.vmem %s5, %s1786
      $region60: #{tpu_custom_call.1} parent=55 // pred_fallthru
        _
    $region56: #{tpu_custom_call.1} parent=5 // pred_fallthru
      _
  $region6: #{tpu_custom_call.1} parent=0 // loop_footer
    %s15 = sadd.s32 1, %s11
  $region7: #{tpu_custom_call.1} parent=0 // loop_footer_branch
    %10 = sbr.rel target = $region3
  $region8: #{tpu_custom_call.1} parent=0 // loop_exit
    _

</llo_original>
